<compile_context>
chip_gen: v6e
topology: v6e:2x2x1
jax: 0.10.0
libtpu: 0.0.40
codegen_flags: <defaults>
</compile_context>

<pallas_src>
import jax
import jax.numpy as jnp
import numpy as np
from jax.experimental import pallas as pl
from jax.experimental.pallas import tpu as pltpu

K = 7           # conv kernel size
P = K // 2      # same-padding


def spatial_attention_kernel(w_ref, b_ref, x_ref, o_ref, pad_ref, shift_ref):
    # w_ref     : SMEM (2*K*K,) f32   -- conv weight flattened [cin, kh, kw]
    # b_ref     : SMEM (1,)     f32   -- conv bias
    # x_ref     : VMEM (BN, C, H, W)
    # o_ref     : VMEM (BN, C, H, W)
    # pad_ref   : VMEM (2, H+2P, BN*(W+2P)) f32  -- lane-packed zero-padded avg/max maps
    # shift_ref : VMEM (2, K, H+2P, Wout)   f32  -- kj lane-shifted copies of pad_ref
    BN, C, H, W = x_ref.shape
    Wseg = W + 2 * P                 # per-image lane segment (interior + halos)
    Wout = shift_ref.shape[-1]       # = BN*Wseg - 2P, packed conv-output width

    # Zero the packed scratch. Only the per-image halo lanes / border rows strictly need
    # it (interiors are overwritten below), but this is a handful of vreg stores per step.
    pad_ref[...] = jnp.zeros_like(pad_ref)

    # ---- channel mean / max per image, written into the packed interior lanes.
    for b in range(BN):
        xb = x_ref[b].astype(jnp.float32)          # (C, H, W)
        avg = jnp.sum(xb, axis=0) * (1.0 / C)      # tree-reduced adds over C
        mx = jnp.max(xb, axis=0)
        lo = b * Wseg + P                          # static lane offset of image b interior
        pad_ref[0, P:P + H, lo:lo + W] = avg
        pad_ref[1, P:P + H, lo:lo + W] = mx

    # ---- hoist the 14 kj lane shifts once (lane-offset load + aligned store).
    for cin in range(2):
        for kj in range(K):
            shift_ref[cin, kj] = pad_ref[cin, :, kj:kj + Wout]

    # ---- direct 7x7 conv, 2 -> 1 channels, fully unrolled (98 taps), covering all BN
    # images at once.  Per tap: a sublane-offset load (ki handled on the load path, no
    # XLU rotate) + scalar*vector FMA.  Four independent partial accumulators break the
    # 98-long serial add chain; bias is folded into the first.
    accs = [
        jnp.full((H, Wout), b_ref[0], jnp.float32),
        jnp.zeros((H, Wout), jnp.float32),
        jnp.zeros((H, Wout), jnp.float32),
        jnp.zeros((H, Wout), jnp.float32),
    ]
    t = 0
    for cin in range(2):
        for kj in range(K):
            for ki in range(K):
                w = w_ref[(cin * K + ki) * K + kj]          # SMEM scalar
                accs[t & 3] = accs[t & 3] + w * shift_ref[cin, kj, ki:ki + H, :]
                t += 1
    conv = (accs[0] + accs[1]) + (accs[2] + accs[3])
    att = jax.nn.sigmoid(conv)                              # (H, Wout) packed attention

    # ---- extract each image's attention map and scale the whole (C, H, W) slab at once.
    for b in range(BN):
        att_b = att[:, b * Wseg:b * Wseg + W]               # (H, W) lane slice
        o_ref[b] = (x_ref[b].astype(jnp.float32) * att_b[None]).astype(o_ref.dtype)


def _tpu_vmem_and_cores():
    """Generation-aware VMEM size / TensorCore-count heuristic."""
    vmem = 64 << 20                       # conservative default (v7x per-TC VMEM)
    try:
        info = pltpu.get_tpu_info()
        vmem = int(getattr(info, "vmem_capacity_bytes", vmem))
    except Exception:
        pass
    # v5e / v6e: 128 MiB VMEM and a single TensorCore per chip.
    # v7x: 64 MiB VMEM per TC and 2 TCs per chip (megacore).
    cores = 1 if vmem >= (96 << 20) else 2
    return vmem, cores


def _pick_block_n(N, slab_bytes, vmem_bytes, cores):
    """Fold several images per grid step.

    Single-TC chips (v5e/v6e): just take the largest block that fits the budget —
    there is no megacore sharding to preserve, bigger blocks amortize the ~0.35us
    per-step overhead.
    2-TC chips (v7x): conservative budget (64 MiB physical) and prefer an even step
    count (ideally >= 4) so both cores get balanced work and still pipeline.
    """
    if cores == 1:
        budget = min(16 << 20, max(1 << 20, vmem_bytes // 8))
    else:
        budget = min(4 << 20, max(1 << 20, vmem_bytes // 16))

    divisors = [d for d in range(1, N + 1) if N % d == 0]
    fitting = [d for d in divisors if d * slab_bytes <= budget] or [1]

    if cores == 1:
        return max(fitting)

    for pred in (lambda s: s >= 4 and s % 2 == 0,
                 lambda s: s >= 2 and s % 2 == 0,
                 lambda s: s >= 2):
        cand = [d for d in fitting if pred(N // d)]
        if cand:
            return max(cand)
    return max(fitting)


def spatial_attention(x, weight, bias):
    """x: (N, C, H, W); weight: (1, 2, K, K); bias: (1,)."""
    N, C, H, W = x.shape
    w_flat = weight.reshape(-1).astype(jnp.float32)   # (2*K*K,)
    b = bias.reshape(-1).astype(jnp.float32)          # (1,)

    itemsize = jnp.dtype(x.dtype).itemsize
    slab_bytes = C * H * W * itemsize

    vmem_bytes, cores = _tpu_vmem_and_cores()
    bn = _pick_block_n(N, slab_bytes, vmem_bytes, cores)

    Wseg = W + 2 * P
    BNW = bn * Wseg
    Wout = BNW - 2 * P

    pad_bytes = 2 * (H + 2 * P) * BNW * 4
    shift_bytes = 2 * K * (H + 2 * P) * Wout * 4
    # in + out blocks (double-buffered) + scratches + slack, clamped to physical VMEM.
    need = 4 * bn * slab_bytes + pad_bytes + shift_bytes + (4 << 20)
    vmem_limit = int(min(vmem_bytes, max(8 << 20, need)))

    cost = pl.CostEstimate(
        flops=int(N * H * W * (3 * C + 4 * K * K)),
        transcendentals=int(N * H * W),
        bytes_accessed=int(2 * N * C * H * W * itemsize + (w_flat.size + 1) * 4),
    )

    return pl.pallas_call(
        spatial_attention_kernel,
        out_shape=jax.ShapeDtypeStruct((N, C, H, W), x.dtype),
        grid_spec=pltpu.PrefetchScalarGridSpec(
            num_scalar_prefetch=0,
            grid=(N // bn,),
            in_specs=[
                pl.BlockSpec(memory_space=pltpu.MemorySpace.SMEM),     # conv weights
                pl.BlockSpec(memory_space=pltpu.MemorySpace.SMEM),     # conv bias
                pl.BlockSpec((bn, C, H, W), lambda n: (n, 0, 0, 0)),   # x
            ],
            out_specs=pl.BlockSpec((bn, C, H, W), lambda n: (n, 0, 0, 0)),
            scratch_shapes=[
                pltpu.VMEM((2, H + 2 * P, BNW), jnp.float32),          # packed padded avg/max
                pltpu.VMEM((2, K, H + 2 * P, Wout), jnp.float32),      # kj-shifted copies
            ],
        ),
        compiler_params=pltpu.CompilerParams(
            dimension_semantics=("parallel",),   # batch steps are independent -> megacore
            vmem_limit_bytes=vmem_limit,
        ),
        cost_estimate=cost,
    )(w_flat, b, x)


def spatial_attention_ref(x, weight, bias):
    """Plain-JAX reference mirroring the PyTorch forward."""
    avg = jnp.mean(x, axis=1, keepdims=True)
    mx = jnp.max(x, axis=1, keepdims=True)
    cat = jnp.concatenate([avg, mx], axis=1)
    conv = jax.lax.conv_general_dilated(
        cat, weight, window_strides=(1, 1), padding=[(P, P), (P, P)],
        dimension_numbers=("NCHW", "OIHW", "NCHW"))
    att = jax.nn.sigmoid(conv + bias.reshape(1, 1, 1, 1))
    return x * att


if __name__ == "__main__":
    key = jax.random.PRNGKey(0)
    kw, kb, kx = jax.random.split(key, 3)

    # deterministic synthetic parameters (Conv2d(2, 1, 7, padding=3) shapes)
    weight = jax.random.normal(kw, (1, 2, K, K), dtype=jnp.float32) * 0.1
    bias = jax.random.normal(kb, (1,), dtype=jnp.float32) * 0.1

    # small NCHW input: batch=2, channels=4, spatial=16x16
    x = jax.random.normal(kx, (2, 4, 16, 16), dtype=jnp.float32)

    out = jax.block_until_ready(spatial_attention(x, weight, bias))
    ref = jax.block_until_ready(spatial_attention_ref(x, weight, bias))

    assert out.shape == x.shape
    assert np.allclose(np.asarray(out), np.asarray(ref), rtol=1e-5, atol=1e-5)

    print("KERNEL_OK")
</pallas_src>

<mosaic_0001>
module attributes {stable_mosaic.version = 11 : i64} {
  func.func @spatial_attention_kernel(%arg0: i32, %arg1: memref<98xf32, #tpu.memory_space<smem>>, %arg2: memref<1xf32, #tpu.memory_space<smem>>, %arg3: memref<1x4x16x16xf32, #tpu.memory_space<vmem>>, %arg4: memref<1x4x16x16xf32, #tpu.memory_space<vmem>>, %arg5: memref<2x22x22xf32, #tpu.memory_space<vmem>>, %arg6: memref<2x7x22x16xf32, #tpu.memory_space<vmem>>) attributes {dimension_semantics = [#tpu.dimension_semantics<parallel>], iteration_bounds = array<i64: 2>, scalar_prefetch = 0 : i64, scratch_operands = 2 : i64, tpu.core_type = #tpu.core_type<tc>, window_params = [{transform_indices = @transform_0, window_bounds = array<i64: 98>}, {transform_indices = @transform_1, window_bounds = array<i64: 1>}, {transform_indices = @transform_2, window_bounds = array<i64: 1, 4, 16, 16>}, {transform_indices = @transform_3, window_bounds = array<i64: 1, 4, 16, 16>}]} {
    %cst = arith.constant 0.000000e+00 : f32
    %0 = vector.broadcast %cst : f32 to vector<2x22x22xf32>
    %c0 = arith.constant 0 : index
    %c0_0 = arith.constant 0 : index
    %c0_1 = arith.constant 0 : index
    %1 = vector.load %arg5[%c0, %c0_0, %c0_1] : memref<2x22x22xf32, #tpu.memory_space<vmem>>, vector<2x22x22xf32>
    tpu.vector_store %arg5[%c0, %c0_0, %c0_1], %0 {strides = array<i32>} : memref<2x22x22xf32, #tpu.memory_space<vmem>>, vector<2x22x22xf32>,
    %c0_2 = arith.constant 0 : index
    %c0_3 = arith.constant 0 : index
    %c0_4 = arith.constant 0 : index
    %c0_5 = arith.constant 0 : index
    %2 = vector.load %arg3[%c0_2, %c0_3, %c0_4, %c0_5] : memref<1x4x16x16xf32, #tpu.memory_space<vmem>>, vector<1x4x16x16xf32>
    %3 = vector.shape_cast %2 : vector<1x4x16x16xf32> to vector<4x16x16xf32>
    %cst_6 = arith.constant dense<0.000000e+00> : vector<16x16xf32>
    %4 = vector.multi_reduction <add>, %3, %cst_6 [0] : vector<4x16x16xf32> to vector<16x16xf32>
    %cst_7 = arith.constant 2.500000e-01 : f32
    %5 = vector.broadcast %cst_7 : f32 to vector<16x16xf32>
    %6 = arith.mulf %4, %5 : vector<16x16xf32>
    %cst_8 = arith.constant dense<0xFF800000> : vector<16x16xf32>
    %7 = vector.multi_reduction <maximumf>, %3, %cst_8 [0] : vector<4x16x16xf32> to vector<16x16xf32>
    %c0_9 = arith.constant 0 : index
    %c3 = arith.constant 3 : index
    %c3_10 = arith.constant 3 : index
    %8 = vector.load %arg5[%c0_9, %c3, %c3_10] : memref<2x22x22xf32, #tpu.memory_space<vmem>>, vector<1x16x16xf32>
    %9 = vector.shape_cast %8 : vector<1x16x16xf32> to vector<16x16xf32>
    %10 = vector.shape_cast %6 : vector<16x16xf32> to vector<1x16x16xf32>
    tpu.vector_store %arg5[%c0_9, %c3, %c3_10], %10 {strides = array<i32>} : memref<2x22x22xf32, #tpu.memory_space<vmem>>, vector<1x16x16xf32>,
    %c1 = arith.constant 1 : index
    %c3_11 = arith.constant 3 : index
    %c3_12 = arith.constant 3 : index
    %11 = vector.load %arg5[%c1, %c3_11, %c3_12] : memref<2x22x22xf32, #tpu.memory_space<vmem>>, vector<1x16x16xf32>
    %12 = vector.shape_cast %11 : vector<1x16x16xf32> to vector<16x16xf32>
    %13 = vector.shape_cast %7 : vector<16x16xf32> to vector<1x16x16xf32>
    tpu.vector_store %arg5[%c1, %c3_11, %c3_12], %13 {strides = array<i32>} : memref<2x22x22xf32, #tpu.memory_space<vmem>>, vector<1x16x16xf32>,
    %c0_13 = arith.constant 0 : index
    %c0_14 = arith.constant 0 : index
    %c0_15 = arith.constant 0 : index
    %14 = vector.load %arg5[%c0_13, %c0_14, %c0_15] : memref<2x22x22xf32, #tpu.memory_space<vmem>>, vector<1x22x16xf32>
    %15 = vector.shape_cast %14 : vector<1x22x16xf32> to vector<22x16xf32>
    %c0_16 = arith.constant 0 : index
    %c0_17 = arith.constant 0 : index
    %c0_18 = arith.constant 0 : index
    %c0_19 = arith.constant 0 : index
    %16 = vector.load %arg6[%c0_16, %c0_17, %c0_18, %c0_19] : memref<2x7x22x16xf32, #tpu.memory_space<vmem>>, vector<1x1x22x16xf32>
    %17 = vector.shape_cast %16 : vector<1x1x22x16xf32> to vector<22x16xf32>
    %18 = vector.shape_cast %15 : vector<22x16xf32> to vector<1x1x22x16xf32>
    tpu.vector_store %arg6[%c0_16, %c0_17, %c0_18, %c0_19], %18 {strides = array<i32>} : memref<2x7x22x16xf32, #tpu.memory_space<vmem>>, vector<1x1x22x16xf32>,
    %c0_20 = arith.constant 0 : index
    %c0_21 = arith.constant 0 : index
    %c1_22 = arith.constant 1 : index
    %19 = vector.load %arg5[%c0_20, %c0_21, %c1_22] : memref<2x22x22xf32, #tpu.memory_space<vmem>>, vector<1x22x16xf32>
    %20 = vector.shape_cast %19 : vector<1x22x16xf32> to vector<22x16xf32>
    %c0_23 = arith.constant 0 : index
    %c1_24 = arith.constant 1 : index
    %c0_25 = arith.constant 0 : index
    %c0_26 = arith.constant 0 : index
    %21 = vector.load %arg6[%c0_23, %c1_24, %c0_25, %c0_26] : memref<2x7x22x16xf32, #tpu.memory_space<vmem>>, vector<1x1x22x16xf32>
    %22 = vector.shape_cast %21 : vector<1x1x22x16xf32> to vector<22x16xf32>
    %23 = vector.shape_cast %20 : vector<22x16xf32> to vector<1x1x22x16xf32>
    tpu.vector_store %arg6[%c0_23, %c1_24, %c0_25, %c0_26], %23 {strides = array<i32>} : memref<2x7x22x16xf32, #tpu.memory_space<vmem>>, vector<1x1x22x16xf32>,
    %c0_27 = arith.constant 0 : index
    %c0_28 = arith.constant 0 : index
    %c2 = arith.constant 2 : index
    %24 = vector.load %arg5[%c0_27, %c0_28, %c2] : memref<2x22x22xf32, #tpu.memory_space<vmem>>, vector<1x22x16xf32>
    %25 = vector.shape_cast %24 : vector<1x22x16xf32> to vector<22x16xf32>
    %c0_29 = arith.constant 0 : index
    %c2_30 = arith.constant 2 : index
    %c0_31 = arith.constant 0 : index
    %c0_32 = arith.constant 0 : index
    %26 = vector.load %arg6[%c0_29, %c2_30, %c0_31, %c0_32] : memref<2x7x22x16xf32, #tpu.memory_space<vmem>>, vector<1x1x22x16xf32>
    %27 = vector.shape_cast %26 : vector<1x1x22x16xf32> to vector<22x16xf32>
    %28 = vector.shape_cast %25 : vector<22x16xf32> to vector<1x1x22x16xf32>
    tpu.vector_store %arg6[%c0_29, %c2_30, %c0_31, %c0_32], %28 {strides = array<i32>} : memref<2x7x22x16xf32, #tpu.memory_space<vmem>>, vector<1x1x22x16xf32>,
    %c0_33 = arith.constant 0 : index
    %c0_34 = arith.constant 0 : index
    %c3_35 = arith.constant 3 : index
    %29 = vector.load %arg5[%c0_33, %c0_34, %c3_35] : memref<2x22x22xf32, #tpu.memory_space<vmem>>, vector<1x22x16xf32>
    %30 = vector.shape_cast %29 : vector<1x22x16xf32> to vector<22x16xf32>
    %c0_36 = arith.constant 0 : index
    %c3_37 = arith.constant 3 : index
    %c0_38 = arith.constant 0 : index
    %c0_39 = arith.constant 0 : index
    %31 = vector.load %arg6[%c0_36, %c3_37, %c0_38, %c0_39] : memref<2x7x22x16xf32, #tpu.memory_space<vmem>>, vector<1x1x22x16xf32>
    %32 = vector.shape_cast %31 : vector<1x1x22x16xf32> to vector<22x16xf32>
    %33 = vector.shape_cast %30 : vector<22x16xf32> to vector<1x1x22x16xf32>
    tpu.vector_store %arg6[%c0_36, %c3_37, %c0_38, %c0_39], %33 {strides = array<i32>} : memref<2x7x22x16xf32, #tpu.memory_space<vmem>>, vector<1x1x22x16xf32>,
    %c0_40 = arith.constant 0 : index
    %c0_41 = arith.constant 0 : index
    %c4 = arith.constant 4 : index
    %34 = vector.load %arg5[%c0_40, %c0_41, %c4] : memref<2x22x22xf32, #tpu.memory_space<vmem>>, vector<1x22x16xf32>
    %35 = vector.shape_cast %34 : vector<1x22x16xf32> to vector<22x16xf32>
    %c0_42 = arith.constant 0 : index
    %c4_43 = arith.constant 4 : index
    %c0_44 = arith.constant 0 : index
    %c0_45 = arith.constant 0 : index
    %36 = vector.load %arg6[%c0_42, %c4_43, %c0_44, %c0_45] : memref<2x7x22x16xf32, #tpu.memory_space<vmem>>, vector<1x1x22x16xf32>
    %37 = vector.shape_cast %36 : vector<1x1x22x16xf32> to vector<22x16xf32>
    %38 = vector.shape_cast %35 : vector<22x16xf32> to vector<1x1x22x16xf32>
    tpu.vector_store %arg6[%c0_42, %c4_43, %c0_44, %c0_45], %38 {strides = array<i32>} : memref<2x7x22x16xf32, #tpu.memory_space<vmem>>, vector<1x1x22x16xf32>,
    %c0_46 = arith.constant 0 : index
    %c0_47 = arith.constant 0 : index
    %c5 = arith.constant 5 : index
    %39 = vector.load %arg5[%c0_46, %c0_47, %c5] : memref<2x22x22xf32, #tpu.memory_space<vmem>>, vector<1x22x16xf32>
    %40 = vector.shape_cast %39 : vector<1x22x16xf32> to vector<22x16xf32>
    %c0_48 = arith.constant 0 : index
    %c5_49 = arith.constant 5 : index
    %c0_50 = arith.constant 0 : index
    %c0_51 = arith.constant 0 : index
    %41 = vector.load %arg6[%c0_48, %c5_49, %c0_50, %c0_51] : memref<2x7x22x16xf32, #tpu.memory_space<vmem>>, vector<1x1x22x16xf32>
    %42 = vector.shape_cast %41 : vector<1x1x22x16xf32> to vector<22x16xf32>
    %43 = vector.shape_cast %40 : vector<22x16xf32> to vector<1x1x22x16xf32>
    tpu.vector_store %arg6[%c0_48, %c5_49, %c0_50, %c0_51], %43 {strides = array<i32>} : memref<2x7x22x16xf32, #tpu.memory_space<vmem>>, vector<1x1x22x16xf32>,
    %c0_52 = arith.constant 0 : index
    %c0_53 = arith.constant 0 : index
    %c6 = arith.constant 6 : index
    %44 = vector.load %arg5[%c0_52, %c0_53, %c6] : memref<2x22x22xf32, #tpu.memory_space<vmem>>, vector<1x22x16xf32>
    %45 = vector.shape_cast %44 : vector<1x22x16xf32> to vector<22x16xf32>
    %c0_54 = arith.constant 0 : index
    %c6_55 = arith.constant 6 : index
    %c0_56 = arith.constant 0 : index
    %c0_57 = arith.constant 0 : index
    %46 = vector.load %arg6[%c0_54, %c6_55, %c0_56, %c0_57] : memref<2x7x22x16xf32, #tpu.memory_space<vmem>>, vector<1x1x22x16xf32>
    %47 = vector.shape_cast %46 : vector<1x1x22x16xf32> to vector<22x16xf32>
    %48 = vector.shape_cast %45 : vector<22x16xf32> to vector<1x1x22x16xf32>
    tpu.vector_store %arg6[%c0_54, %c6_55, %c0_56, %c0_57], %48 {strides = array<i32>} : memref<2x7x22x16xf32, #tpu.memory_space<vmem>>, vector<1x1x22x16xf32>,
    %c1_58 = arith.constant 1 : index
    %c0_59 = arith.constant 0 : index
    %c0_60 = arith.constant 0 : index
    %49 = vector.load %arg5[%c1_58, %c0_59, %c0_60] : memref<2x22x22xf32, #tpu.memory_space<vmem>>, vector<1x22x16xf32>
    %50 = vector.shape_cast %49 : vector<1x22x16xf32> to vector<22x16xf32>
    %c1_61 = arith.constant 1 : index
    %c0_62 = arith.constant 0 : index
    %c0_63 = arith.constant 0 : index
    %c0_64 = arith.constant 0 : index
    %51 = vector.load %arg6[%c1_61, %c0_62, %c0_63, %c0_64] : memref<2x7x22x16xf32, #tpu.memory_space<vmem>>, vector<1x1x22x16xf32>
    %52 = vector.shape_cast %51 : vector<1x1x22x16xf32> to vector<22x16xf32>
    %53 = vector.shape_cast %50 : vector<22x16xf32> to vector<1x1x22x16xf32>
    tpu.vector_store %arg6[%c1_61, %c0_62, %c0_63, %c0_64], %53 {strides = array<i32>} : memref<2x7x22x16xf32, #tpu.memory_space<vmem>>, vector<1x1x22x16xf32>,
    %c1_65 = arith.constant 1 : index
    %c0_66 = arith.constant 0 : index
    %c1_67 = arith.constant 1 : index
    %54 = vector.load %arg5[%c1_65, %c0_66, %c1_67] : memref<2x22x22xf32, #tpu.memory_space<vmem>>, vector<1x22x16xf32>
    %55 = vector.shape_cast %54 : vector<1x22x16xf32> to vector<22x16xf32>
    %c1_68 = arith.constant 1 : index
    %c1_69 = arith.constant 1 : index
    %c0_70 = arith.constant 0 : index
    %c0_71 = arith.constant 0 : index
    %56 = vector.load %arg6[%c1_68, %c1_69, %c0_70, %c0_71] : memref<2x7x22x16xf32, #tpu.memory_space<vmem>>, vector<1x1x22x16xf32>
    %57 = vector.shape_cast %56 : vector<1x1x22x16xf32> to vector<22x16xf32>
    %58 = vector.shape_cast %55 : vector<22x16xf32> to vector<1x1x22x16xf32>
    tpu.vector_store %arg6[%c1_68, %c1_69, %c0_70, %c0_71], %58 {strides = array<i32>} : memref<2x7x22x16xf32, #tpu.memory_space<vmem>>, vector<1x1x22x16xf32>,
    %c1_72 = arith.constant 1 : index
    %c0_73 = arith.constant 0 : index
    %c2_74 = arith.constant 2 : index
    %59 = vector.load %arg5[%c1_72, %c0_73, %c2_74] : memref<2x22x22xf32, #tpu.memory_space<vmem>>, vector<1x22x16xf32>
    %60 = vector.shape_cast %59 : vector<1x22x16xf32> to vector<22x16xf32>
    %c1_75 = arith.constant 1 : index
    %c2_76 = arith.constant 2 : index
    %c0_77 = arith.constant 0 : index
    %c0_78 = arith.constant 0 : index
    %61 = vector.load %arg6[%c1_75, %c2_76, %c0_77, %c0_78] : memref<2x7x22x16xf32, #tpu.memory_space<vmem>>, vector<1x1x22x16xf32>
    %62 = vector.shape_cast %61 : vector<1x1x22x16xf32> to vector<22x16xf32>
    %63 = vector.shape_cast %60 : vector<22x16xf32> to vector<1x1x22x16xf32>
    tpu.vector_store %arg6[%c1_75, %c2_76, %c0_77, %c0_78], %63 {strides = array<i32>} : memref<2x7x22x16xf32, #tpu.memory_space<vmem>>, vector<1x1x22x16xf32>,
    %c1_79 = arith.constant 1 : index
    %c0_80 = arith.constant 0 : index
    %c3_81 = arith.constant 3 : index
    %64 = vector.load %arg5[%c1_79, %c0_80, %c3_81] : memref<2x22x22xf32, #tpu.memory_space<vmem>>, vector<1x22x16xf32>
    %65 = vector.shape_cast %64 : vector<1x22x16xf32> to vector<22x16xf32>
    %c1_82 = arith.constant 1 : index
    %c3_83 = arith.constant 3 : index
    %c0_84 = arith.constant 0 : index
    %c0_85 = arith.constant 0 : index
    %66 = vector.load %arg6[%c1_82, %c3_83, %c0_84, %c0_85] : memref<2x7x22x16xf32, #tpu.memory_space<vmem>>, vector<1x1x22x16xf32>
    %67 = vector.shape_cast %66 : vector<1x1x22x16xf32> to vector<22x16xf32>
    %68 = vector.shape_cast %65 : vector<22x16xf32> to vector<1x1x22x16xf32>
    tpu.vector_store %arg6[%c1_82, %c3_83, %c0_84, %c0_85], %68 {strides = array<i32>} : memref<2x7x22x16xf32, #tpu.memory_space<vmem>>, vector<1x1x22x16xf32>,
    %c1_86 = arith.constant 1 : index
    %c0_87 = arith.constant 0 : index
    %c4_88 = arith.constant 4 : index
    %69 = vector.load %arg5[%c1_86, %c0_87, %c4_88] : memref<2x22x22xf32, #tpu.memory_space<vmem>>, vector<1x22x16xf32>
    %70 = vector.shape_cast %69 : vector<1x22x16xf32> to vector<22x16xf32>
    %c1_89 = arith.constant 1 : index
    %c4_90 = arith.constant 4 : index
    %c0_91 = arith.constant 0 : index
    %c0_92 = arith.constant 0 : index
    %71 = vector.load %arg6[%c1_89, %c4_90, %c0_91, %c0_92] : memref<2x7x22x16xf32, #tpu.memory_space<vmem>>, vector<1x1x22x16xf32>
    %72 = vector.shape_cast %71 : vector<1x1x22x16xf32> to vector<22x16xf32>
    %73 = vector.shape_cast %70 : vector<22x16xf32> to vector<1x1x22x16xf32>
    tpu.vector_store %arg6[%c1_89, %c4_90, %c0_91, %c0_92], %73 {strides = array<i32>} : memref<2x7x22x16xf32, #tpu.memory_space<vmem>>, vector<1x1x22x16xf32>,
    %c1_93 = arith.constant 1 : index
    %c0_94 = arith.constant 0 : index
    %c5_95 = arith.constant 5 : index
    %74 = vector.load %arg5[%c1_93, %c0_94, %c5_95] : memref<2x22x22xf32, #tpu.memory_space<vmem>>, vector<1x22x16xf32>
    %75 = vector.shape_cast %74 : vector<1x22x16xf32> to vector<22x16xf32>
    %c1_96 = arith.constant 1 : index
    %c5_97 = arith.constant 5 : index
    %c0_98 = arith.constant 0 : index
    %c0_99 = arith.constant 0 : index
    %76 = vector.load %arg6[%c1_96, %c5_97, %c0_98, %c0_99] : memref<2x7x22x16xf32, #tpu.memory_space<vmem>>, vector<1x1x22x16xf32>
    %77 = vector.shape_cast %76 : vector<1x1x22x16xf32> to vector<22x16xf32>
    %78 = vector.shape_cast %75 : vector<22x16xf32> to vector<1x1x22x16xf32>
    tpu.vector_store %arg6[%c1_96, %c5_97, %c0_98, %c0_99], %78 {strides = array<i32>} : memref<2x7x22x16xf32, #tpu.memory_space<vmem>>, vector<1x1x22x16xf32>,
    %c1_100 = arith.constant 1 : index
    %c0_101 = arith.constant 0 : index
    %c6_102 = arith.constant 6 : index
    %79 = vector.load %arg5[%c1_100, %c0_101, %c6_102] : memref<2x22x22xf32, #tpu.memory_space<vmem>>, vector<1x22x16xf32>
    %80 = vector.shape_cast %79 : vector<1x22x16xf32> to vector<22x16xf32>
    %c1_103 = arith.constant 1 : index
    %c6_104 = arith.constant 6 : index
    %c0_105 = arith.constant 0 : index
    %c0_106 = arith.constant 0 : index
    %81 = vector.load %arg6[%c1_103, %c6_104, %c0_105, %c0_106] : memref<2x7x22x16xf32, #tpu.memory_space<vmem>>, vector<1x1x22x16xf32>
    %82 = vector.shape_cast %81 : vector<1x1x22x16xf32> to vector<22x16xf32>
    %83 = vector.shape_cast %80 : vector<22x16xf32> to vector<1x1x22x16xf32>
    tpu.vector_store %arg6[%c1_103, %c6_104, %c0_105, %c0_106], %83 {strides = array<i32>} : memref<2x7x22x16xf32, #tpu.memory_space<vmem>>, vector<1x1x22x16xf32>,
    %c0_107 = arith.constant 0 : index
    %84 = memref.load %arg2[%c0_107] : memref<1xf32, #tpu.memory_space<smem>>
    %85 = vector.broadcast %84 : f32 to vector<16x16xf32>
    %cst_108 = arith.constant 0.000000e+00 : f32
    %86 = vector.broadcast %cst_108 : f32 to vector<16x16xf32>
    %cst_109 = arith.constant 0.000000e+00 : f32
    %87 = vector.broadcast %cst_109 : f32 to vector<16x16xf32>
    %cst_110 = arith.constant 0.000000e+00 : f32
    %88 = vector.broadcast %cst_110 : f32 to vector<16x16xf32>
    %c0_111 = arith.constant 0 : index
    %89 = memref.load %arg1[%c0_111] : memref<98xf32, #tpu.memory_space<smem>>
    %c0_112 = arith.constant 0 : index
    %c0_113 = arith.constant 0 : index
    %c0_114 = arith.constant 0 : index
    %c0_115 = arith.constant 0 : index
    %90 = vector.load %arg6[%c0_112, %c0_113, %c0_114, %c0_115] : memref<2x7x22x16xf32, #tpu.memory_space<vmem>>, vector<1x1x16x16xf32>
    %91 = vector.shape_cast %90 : vector<1x1x16x16xf32> to vector<16x16xf32>
    %92 = vector.broadcast %89 : f32 to vector<16x16xf32>
    %93 = arith.mulf %92, %91 : vector<16x16xf32>
    %94 = arith.addf %85, %93 : vector<16x16xf32>
    %c7 = arith.constant 7 : index
    %95 = memref.load %arg1[%c7] : memref<98xf32, #tpu.memory_space<smem>>
    %c0_116 = arith.constant 0 : index
    %c0_117 = arith.constant 0 : index
    %c1_118 = arith.constant 1 : index
    %c0_119 = arith.constant 0 : index
    %96 = vector.load %arg6[%c0_116, %c0_117, %c1_118, %c0_119] : memref<2x7x22x16xf32, #tpu.memory_space<vmem>>, vector<1x1x16x16xf32>
    %97 = vector.shape_cast %96 : vector<1x1x16x16xf32> to vector<16x16xf32>
    %98 = vector.broadcast %95 : f32 to vector<16x16xf32>
    %99 = arith.mulf %98, %97 : vector<16x16xf32>
    %100 = arith.addf %86, %99 : vector<16x16xf32>
    %c14 = arith.constant 14 : index
    %101 = memref.load %arg1[%c14] : memref<98xf32, #tpu.memory_space<smem>>
    %c0_120 = arith.constant 0 : index
    %c0_121 = arith.constant 0 : index
    %c2_122 = arith.constant 2 : index
    %c0_123 = arith.constant 0 : index
    %102 = vector.load %arg6[%c0_120, %c0_121, %c2_122, %c0_123] : memref<2x7x22x16xf32, #tpu.memory_space<vmem>>, vector<1x1x16x16xf32>
    %103 = vector.shape_cast %102 : vector<1x1x16x16xf32> to vector<16x16xf32>
    %104 = vector.broadcast %101 : f32 to vector<16x16xf32>
    %105 = arith.mulf %104, %103 : vector<16x16xf32>
    %106 = arith.addf %87, %105 : vector<16x16xf32>
    %c21 = arith.constant 21 : index
    %107 = memref.load %arg1[%c21] : memref<98xf32, #tpu.memory_space<smem>>
    %c0_124 = arith.constant 0 : index
    %c0_125 = arith.constant 0 : index
    %c3_126 = arith.constant 3 : index
    %c0_127 = arith.constant 0 : index
    %108 = vector.load %arg6[%c0_124, %c0_125, %c3_126, %c0_127] : memref<2x7x22x16xf32, #tpu.memory_space<vmem>>, vector<1x1x16x16xf32>
    %109 = vector.shape_cast %108 : vector<1x1x16x16xf32> to vector<16x16xf32>
    %110 = vector.broadcast %107 : f32 to vector<16x16xf32>
    %111 = arith.mulf %110, %109 : vector<16x16xf32>
    %112 = arith.addf %88, %111 : vector<16x16xf32>
    %c28 = arith.constant 28 : index
    %113 = memref.load %arg1[%c28] : memref<98xf32, #tpu.memory_space<smem>>
    %c0_128 = arith.constant 0 : index
    %c0_129 = arith.constant 0 : index
    %c4_130 = arith.constant 4 : index
    %c0_131 = arith.constant 0 : index
    %114 = vector.load %arg6[%c0_128, %c0_129, %c4_130, %c0_131] : memref<2x7x22x16xf32, #tpu.memory_space<vmem>>, vector<1x1x16x16xf32>
    %115 = vector.shape_cast %114 : vector<1x1x16x16xf32> to vector<16x16xf32>
    %116 = vector.broadcast %113 : f32 to vector<16x16xf32>
    %117 = arith.mulf %116, %115 : vector<16x16xf32>
    %118 = arith.addf %94, %117 : vector<16x16xf32>
    %c35 = arith.constant 35 : index
    %119 = memref.load %arg1[%c35] : memref<98xf32, #tpu.memory_space<smem>>
    %c0_132 = arith.constant 0 : index
    %c0_133 = arith.constant 0 : index
    %c5_134 = arith.constant 5 : index
    %c0_135 = arith.constant 0 : index
    %120 = vector.load %arg6[%c0_132, %c0_133, %c5_134, %c0_135] : memref<2x7x22x16xf32, #tpu.memory_space<vmem>>, vector<1x1x16x16xf32>
    %121 = vector.shape_cast %120 : vector<1x1x16x16xf32> to vector<16x16xf32>
    %122 = vector.broadcast %119 : f32 to vector<16x16xf32>
    %123 = arith.mulf %122, %121 : vector<16x16xf32>
    %124 = arith.addf %100, %123 : vector<16x16xf32>
    %c42 = arith.constant 42 : index
    %125 = memref.load %arg1[%c42] : memref<98xf32, #tpu.memory_space<smem>>
    %c0_136 = arith.constant 0 : index
    %c0_137 = arith.constant 0 : index
    %c6_138 = arith.constant 6 : index
    %c0_139 = arith.constant 0 : index
    %126 = vector.load %arg6[%c0_136, %c0_137, %c6_138, %c0_139] : memref<2x7x22x16xf32, #tpu.memory_space<vmem>>, vector<1x1x16x16xf32>
    %127 = vector.shape_cast %126 : vector<1x1x16x16xf32> to vector<16x16xf32>
    %128 = vector.broadcast %125 : f32 to vector<16x16xf32>
    %129 = arith.mulf %128, %127 : vector<16x16xf32>
    %130 = arith.addf %106, %129 : vector<16x16xf32>
    %c1_140 = arith.constant 1 : index
    %131 = memref.load %arg1[%c1_140] : memref<98xf32, #tpu.memory_space<smem>>
    %c0_141 = arith.constant 0 : index
    %c1_142 = arith.constant 1 : index
    %c0_143 = arith.constant 0 : index
    %c0_144 = arith.constant 0 : index
    %132 = vector.load %arg6[%c0_141, %c1_142, %c0_143, %c0_144] : memref<2x7x22x16xf32, #tpu.memory_space<vmem>>, vector<1x1x16x16xf32>
    %133 = vector.shape_cast %132 : vector<1x1x16x16xf32> to vector<16x16xf32>
    %134 = vector.broadcast %131 : f32 to vector<16x16xf32>
    %135 = arith.mulf %134, %133 : vector<16x16xf32>
    %136 = arith.addf %112, %135 : vector<16x16xf32>
    %c8 = arith.constant 8 : index
    %137 = memref.load %arg1[%c8] : memref<98xf32, #tpu.memory_space<smem>>
    %c0_145 = arith.constant 0 : index
    %c1_146 = arith.constant 1 : index
    %c1_147 = arith.constant 1 : index
    %c0_148 = arith.constant 0 : index
    %138 = vector.load %arg6[%c0_145, %c1_146, %c1_147, %c0_148] : memref<2x7x22x16xf32, #tpu.memory_space<vmem>>, vector<1x1x16x16xf32>
    %139 = vector.shape_cast %138 : vector<1x1x16x16xf32> to vector<16x16xf32>
    %140 = vector.broadcast %137 : f32 to vector<16x16xf32>
    %141 = arith.mulf %140, %139 : vector<16x16xf32>
    %142 = arith.addf %118, %141 : vector<16x16xf32>
    %c15 = arith.constant 15 : index
    %143 = memref.load %arg1[%c15] : memref<98xf32, #tpu.memory_space<smem>>
    %c0_149 = arith.constant 0 : index
    %c1_150 = arith.constant 1 : index
    %c2_151 = arith.constant 2 : index
    %c0_152 = arith.constant 0 : index
    %144 = vector.load %arg6[%c0_149, %c1_150, %c2_151, %c0_152] : memref<2x7x22x16xf32, #tpu.memory_space<vmem>>, vector<1x1x16x16xf32>
    %145 = vector.shape_cast %144 : vector<1x1x16x16xf32> to vector<16x16xf32>
    %146 = vector.broadcast %143 : f32 to vector<16x16xf32>
    %147 = arith.mulf %146, %145 : vector<16x16xf32>
    %148 = arith.addf %124, %147 : vector<16x16xf32>
    %c22 = arith.constant 22 : index
    %149 = memref.load %arg1[%c22] : memref<98xf32, #tpu.memory_space<smem>>
    %c0_153 = arith.constant 0 : index
    %c1_154 = arith.constant 1 : index
    %c3_155 = arith.constant 3 : index
    %c0_156 = arith.constant 0 : index
    %150 = vector.load %arg6[%c0_153, %c1_154, %c3_155, %c0_156] : memref<2x7x22x16xf32, #tpu.memory_space<vmem>>, vector<1x1x16x16xf32>
    %151 = vector.shape_cast %150 : vector<1x1x16x16xf32> to vector<16x16xf32>
    %152 = vector.broadcast %149 : f32 to vector<16x16xf32>
    %153 = arith.mulf %152, %151 : vector<16x16xf32>
    %154 = arith.addf %130, %153 : vector<16x16xf32>
    %c29 = arith.constant 29 : index
    %155 = memref.load %arg1[%c29] : memref<98xf32, #tpu.memory_space<smem>>
    %c0_157 = arith.constant 0 : index
    %c1_158 = arith.constant 1 : index
    %c4_159 = arith.constant 4 : index
    %c0_160 = arith.constant 0 : index
    %156 = vector.load %arg6[%c0_157, %c1_158, %c4_159, %c0_160] : memref<2x7x22x16xf32, #tpu.memory_space<vmem>>, vector<1x1x16x16xf32>
    %157 = vector.shape_cast %156 : vector<1x1x16x16xf32> to vector<16x16xf32>
    %158 = vector.broadcast %155 : f32 to vector<16x16xf32>
    %159 = arith.mulf %158, %157 : vector<16x16xf32>
    %160 = arith.addf %136, %159 : vector<16x16xf32>
    %c36 = arith.constant 36 : index
    %161 = memref.load %arg1[%c36] : memref<98xf32, #tpu.memory_space<smem>>
    %c0_161 = arith.constant 0 : index
    %c1_162 = arith.constant 1 : index
    %c5_163 = arith.constant 5 : index
    %c0_164 = arith.constant 0 : index
    %162 = vector.load %arg6[%c0_161, %c1_162, %c5_163, %c0_164] : memref<2x7x22x16xf32, #tpu.memory_space<vmem>>, vector<1x1x16x16xf32>
    %163 = vector.shape_cast %162 : vector<1x1x16x16xf32> to vector<16x16xf32>
    %164 = vector.broadcast %161 : f32 to vector<16x16xf32>
    %165 = arith.mulf %164, %163 : vector<16x16xf32>
    %166 = arith.addf %142, %165 : vector<16x16xf32>
    %c43 = arith.constant 43 : index
    %167 = memref.load %arg1[%c43] : memref<98xf32, #tpu.memory_space<smem>>
    %c0_165 = arith.constant 0 : index
    %c1_166 = arith.constant 1 : index
    %c6_167 = arith.constant 6 : index
    %c0_168 = arith.constant 0 : index
    %168 = vector.load %arg6[%c0_165, %c1_166, %c6_167, %c0_168] : memref<2x7x22x16xf32, #tpu.memory_space<vmem>>, vector<1x1x16x16xf32>
    %169 = vector.shape_cast %168 : vector<1x1x16x16xf32> to vector<16x16xf32>
    %170 = vector.broadcast %167 : f32 to vector<16x16xf32>
    %171 = arith.mulf %170, %169 : vector<16x16xf32>
    %172 = arith.addf %148, %171 : vector<16x16xf32>
    %c2_169 = arith.constant 2 : index
    %173 = memref.load %arg1[%c2_169] : memref<98xf32, #tpu.memory_space<smem>>
    %c0_170 = arith.constant 0 : index
    %c2_171 = arith.constant 2 : index
    %c0_172 = arith.constant 0 : index
    %c0_173 = arith.constant 0 : index
    %174 = vector.load %arg6[%c0_170, %c2_171, %c0_172, %c0_173] : memref<2x7x22x16xf32, #tpu.memory_space<vmem>>, vector<1x1x16x16xf32>
    %175 = vector.shape_cast %174 : vector<1x1x16x16xf32> to vector<16x16xf32>
    %176 = vector.broadcast %173 : f32 to vector<16x16xf32>
    %177 = arith.mulf %176, %175 : vector<16x16xf32>
    %178 = arith.addf %154, %177 : vector<16x16xf32>
    %c9 = arith.constant 9 : index
    %179 = memref.load %arg1[%c9] : memref<98xf32, #tpu.memory_space<smem>>
    %c0_174 = arith.constant 0 : index
    %c2_175 = arith.constant 2 : index
    %c1_176 = arith.constant 1 : index
    %c0_177 = arith.constant 0 : index
    %180 = vector.load %arg6[%c0_174, %c2_175, %c1_176, %c0_177] : memref<2x7x22x16xf32, #tpu.memory_space<vmem>>, vector<1x1x16x16xf32>
    %181 = vector.shape_cast %180 : vector<1x1x16x16xf32> to vector<16x16xf32>
    %182 = vector.broadcast %179 : f32 to vector<16x16xf32>
    %183 = arith.mulf %182, %181 : vector<16x16xf32>
    %184 = arith.addf %160, %183 : vector<16x16xf32>
    %c16 = arith.constant 16 : index
    %185 = memref.load %arg1[%c16] : memref<98xf32, #tpu.memory_space<smem>>
    %c0_178 = arith.constant 0 : index
    %c2_179 = arith.constant 2 : index
    %c2_180 = arith.constant 2 : index
    %c0_181 = arith.constant 0 : index
    %186 = vector.load %arg6[%c0_178, %c2_179, %c2_180, %c0_181] : memref<2x7x22x16xf32, #tpu.memory_space<vmem>>, vector<1x1x16x16xf32>
    %187 = vector.shape_cast %186 : vector<1x1x16x16xf32> to vector<16x16xf32>
    %188 = vector.broadcast %185 : f32 to vector<16x16xf32>
    %189 = arith.mulf %188, %187 : vector<16x16xf32>
    %190 = arith.addf %166, %189 : vector<16x16xf32>
    %c23 = arith.constant 23 : index
    %191 = memref.load %arg1[%c23] : memref<98xf32, #tpu.memory_space<smem>>
    %c0_182 = arith.constant 0 : index
    %c2_183 = arith.constant 2 : index
    %c3_184 = arith.constant 3 : index
    %c0_185 = arith.constant 0 : index
    %192 = vector.load %arg6[%c0_182, %c2_183, %c3_184, %c0_185] : memref<2x7x22x16xf32, #tpu.memory_space<vmem>>, vector<1x1x16x16xf32>
    %193 = vector.shape_cast %192 : vector<1x1x16x16xf32> to vector<16x16xf32>
    %194 = vector.broadcast %191 : f32 to vector<16x16xf32>
    %195 = arith.mulf %194, %193 : vector<16x16xf32>
    %196 = arith.addf %172, %195 : vector<16x16xf32>
    %c30 = arith.constant 30 : index
    %197 = memref.load %arg1[%c30] : memref<98xf32, #tpu.memory_space<smem>>
    %c0_186 = arith.constant 0 : index
    %c2_187 = arith.constant 2 : index
    %c4_188 = arith.constant 4 : index
    %c0_189 = arith.constant 0 : index
    %198 = vector.load %arg6[%c0_186, %c2_187, %c4_188, %c0_189] : memref<2x7x22x16xf32, #tpu.memory_space<vmem>>, vector<1x1x16x16xf32>
    %199 = vector.shape_cast %198 : vector<1x1x16x16xf32> to vector<16x16xf32>
    %200 = vector.broadcast %197 : f32 to vector<16x16xf32>
    %201 = arith.mulf %200, %199 : vector<16x16xf32>
    %202 = arith.addf %178, %201 : vector<16x16xf32>
    %c37 = arith.constant 37 : index
    %203 = memref.load %arg1[%c37] : memref<98xf32, #tpu.memory_space<smem>>
    %c0_190 = arith.constant 0 : index
    %c2_191 = arith.constant 2 : index
    %c5_192 = arith.constant 5 : index
    %c0_193 = arith.constant 0 : index
    %204 = vector.load %arg6[%c0_190, %c2_191, %c5_192, %c0_193] : memref<2x7x22x16xf32, #tpu.memory_space<vmem>>, vector<1x1x16x16xf32>
    %205 = vector.shape_cast %204 : vector<1x1x16x16xf32> to vector<16x16xf32>
    %206 = vector.broadcast %203 : f32 to vector<16x16xf32>
    %207 = arith.mulf %206, %205 : vector<16x16xf32>
    %208 = arith.addf %184, %207 : vector<16x16xf32>
    %c44 = arith.constant 44 : index
    %209 = memref.load %arg1[%c44] : memref<98xf32, #tpu.memory_space<smem>>
    %c0_194 = arith.constant 0 : index
    %c2_195 = arith.constant 2 : index
    %c6_196 = arith.constant 6 : index
    %c0_197 = arith.constant 0 : index
    %210 = vector.load %arg6[%c0_194, %c2_195, %c6_196, %c0_197] : memref<2x7x22x16xf32, #tpu.memory_space<vmem>>, vector<1x1x16x16xf32>
    %211 = vector.shape_cast %210 : vector<1x1x16x16xf32> to vector<16x16xf32>
    %212 = vector.broadcast %209 : f32 to vector<16x16xf32>
    %213 = arith.mulf %212, %211 : vector<16x16xf32>
    %214 = arith.addf %190, %213 : vector<16x16xf32>
    %c3_198 = arith.constant 3 : index
    %215 = memref.load %arg1[%c3_198] : memref<98xf32, #tpu.memory_space<smem>>
    %c0_199 = arith.constant 0 : index
    %c3_200 = arith.constant 3 : index
    %c0_201 = arith.constant 0 : index
    %c0_202 = arith.constant 0 : index
    %216 = vector.load %arg6[%c0_199, %c3_200, %c0_201, %c0_202] : memref<2x7x22x16xf32, #tpu.memory_space<vmem>>, vector<1x1x16x16xf32>
    %217 = vector.shape_cast %216 : vector<1x1x16x16xf32> to vector<16x16xf32>
    %218 = vector.broadcast %215 : f32 to vector<16x16xf32>
    %219 = arith.mulf %218, %217 : vector<16x16xf32>
    %220 = arith.addf %196, %219 : vector<16x16xf32>
    %c10 = arith.constant 10 : index
    %221 = memref.load %arg1[%c10] : memref<98xf32, #tpu.memory_space<smem>>
    %c0_203 = arith.constant 0 : index
    %c3_204 = arith.constant 3 : index
    %c1_205 = arith.constant 1 : index
    %c0_206 = arith.constant 0 : index
    %222 = vector.load %arg6[%c0_203, %c3_204, %c1_205, %c0_206] : memref<2x7x22x16xf32, #tpu.memory_space<vmem>>, vector<1x1x16x16xf32>
    %223 = vector.shape_cast %222 : vector<1x1x16x16xf32> to vector<16x16xf32>
    %224 = vector.broadcast %221 : f32 to vector<16x16xf32>
    %225 = arith.mulf %224, %223 : vector<16x16xf32>
    %226 = arith.addf %202, %225 : vector<16x16xf32>
    %c17 = arith.constant 17 : index
    %227 = memref.load %arg1[%c17] : memref<98xf32, #tpu.memory_space<smem>>
    %c0_207 = arith.constant 0 : index
    %c3_208 = arith.constant 3 : index
    %c2_209 = arith.constant 2 : index
    %c0_210 = arith.constant 0 : index
    %228 = vector.load %arg6[%c0_207, %c3_208, %c2_209, %c0_210] : memref<2x7x22x16xf32, #tpu.memory_space<vmem>>, vector<1x1x16x16xf32>
    %229 = vector.shape_cast %228 : vector<1x1x16x16xf32> to vector<16x16xf32>
    %230 = vector.broadcast %227 : f32 to vector<16x16xf32>
    %231 = arith.mulf %230, %229 : vector<16x16xf32>
    %232 = arith.addf %208, %231 : vector<16x16xf32>
    %c24 = arith.constant 24 : index
    %233 = memref.load %arg1[%c24] : memref<98xf32, #tpu.memory_space<smem>>
    %c0_211 = arith.constant 0 : index
    %c3_212 = arith.constant 3 : index
    %c3_213 = arith.constant 3 : index
    %c0_214 = arith.constant 0 : index
    %234 = vector.load %arg6[%c0_211, %c3_212, %c3_213, %c0_214] : memref<2x7x22x16xf32, #tpu.memory_space<vmem>>, vector<1x1x16x16xf32>
    %235 = vector.shape_cast %234 : vector<1x1x16x16xf32> to vector<16x16xf32>
    %236 = vector.broadcast %233 : f32 to vector<16x16xf32>
    %237 = arith.mulf %236, %235 : vector<16x16xf32>
    %238 = arith.addf %214, %237 : vector<16x16xf32>
    %c31 = arith.constant 31 : index
    %239 = memref.load %arg1[%c31] : memref<98xf32, #tpu.memory_space<smem>>
    %c0_215 = arith.constant 0 : index
    %c3_216 = arith.constant 3 : index
    %c4_217 = arith.constant 4 : index
    %c0_218 = arith.constant 0 : index
    %240 = vector.load %arg6[%c0_215, %c3_216, %c4_217, %c0_218] : memref<2x7x22x16xf32, #tpu.memory_space<vmem>>, vector<1x1x16x16xf32>
    %241 = vector.shape_cast %240 : vector<1x1x16x16xf32> to vector<16x16xf32>
    %242 = vector.broadcast %239 : f32 to vector<16x16xf32>
    %243 = arith.mulf %242, %241 : vector<16x16xf32>
    %244 = arith.addf %220, %243 : vector<16x16xf32>
    %c38 = arith.constant 38 : index
    %245 = memref.load %arg1[%c38] : memref<98xf32, #tpu.memory_space<smem>>
    %c0_219 = arith.constant 0 : index
    %c3_220 = arith.constant 3 : index
    %c5_221 = arith.constant 5 : index
    %c0_222 = arith.constant 0 : index
    %246 = vector.load %arg6[%c0_219, %c3_220, %c5_221, %c0_222] : memref<2x7x22x16xf32, #tpu.memory_space<vmem>>, vector<1x1x16x16xf32>
    %247 = vector.shape_cast %246 : vector<1x1x16x16xf32> to vector<16x16xf32>
    %248 = vector.broadcast %245 : f32 to vector<16x16xf32>
    %249 = arith.mulf %248, %247 : vector<16x16xf32>
    %250 = arith.addf %226, %249 : vector<16x16xf32>
    %c45 = arith.constant 45 : index
    %251 = memref.load %arg1[%c45] : memref<98xf32, #tpu.memory_space<smem>>
    %c0_223 = arith.constant 0 : index
    %c3_224 = arith.constant 3 : index
    %c6_225 = arith.constant 6 : index
    %c0_226 = arith.constant 0 : index
    %252 = vector.load %arg6[%c0_223, %c3_224, %c6_225, %c0_226] : memref<2x7x22x16xf32, #tpu.memory_space<vmem>>, vector<1x1x16x16xf32>
    %253 = vector.shape_cast %252 : vector<1x1x16x16xf32> to vector<16x16xf32>
    %254 = vector.broadcast %251 : f32 to vector<16x16xf32>
    %255 = arith.mulf %254, %253 : vector<16x16xf32>
    %256 = arith.addf %232, %255 : vector<16x16xf32>
    %c4_227 = arith.constant 4 : index
    %257 = memref.load %arg1[%c4_227] : memref<98xf32, #tpu.memory_space<smem>>
    %c0_228 = arith.constant 0 : index
    %c4_229 = arith.constant 4 : index
    %c0_230 = arith.constant 0 : index
    %c0_231 = arith.constant 0 : index
    %258 = vector.load %arg6[%c0_228, %c4_229, %c0_230, %c0_231] : memref<2x7x22x16xf32, #tpu.memory_space<vmem>>, vector<1x1x16x16xf32>
    %259 = vector.shape_cast %258 : vector<1x1x16x16xf32> to vector<16x16xf32>
    %260 = vector.broadcast %257 : f32 to vector<16x16xf32>
    %261 = arith.mulf %260, %259 : vector<16x16xf32>
    %262 = arith.addf %238, %261 : vector<16x16xf32>
    %c11 = arith.constant 11 : index
    %263 = memref.load %arg1[%c11] : memref<98xf32, #tpu.memory_space<smem>>
    %c0_232 = arith.constant 0 : index
    %c4_233 = arith.constant 4 : index
    %c1_234 = arith.constant 1 : index
    %c0_235 = arith.constant 0 : index
    %264 = vector.load %arg6[%c0_232, %c4_233, %c1_234, %c0_235] : memref<2x7x22x16xf32, #tpu.memory_space<vmem>>, vector<1x1x16x16xf32>
    %265 = vector.shape_cast %264 : vector<1x1x16x16xf32> to vector<16x16xf32>
    %266 = vector.broadcast %263 : f32 to vector<16x16xf32>
    %267 = arith.mulf %266, %265 : vector<16x16xf32>
    %268 = arith.addf %244, %267 : vector<16x16xf32>
    %c18 = arith.constant 18 : index
    %269 = memref.load %arg1[%c18] : memref<98xf32, #tpu.memory_space<smem>>
    %c0_236 = arith.constant 0 : index
    %c4_237 = arith.constant 4 : index
    %c2_238 = arith.constant 2 : index
    %c0_239 = arith.constant 0 : index
    %270 = vector.load %arg6[%c0_236, %c4_237, %c2_238, %c0_239] : memref<2x7x22x16xf32, #tpu.memory_space<vmem>>, vector<1x1x16x16xf32>
    %271 = vector.shape_cast %270 : vector<1x1x16x16xf32> to vector<16x16xf32>
    %272 = vector.broadcast %269 : f32 to vector<16x16xf32>
    %273 = arith.mulf %272, %271 : vector<16x16xf32>
    %274 = arith.addf %250, %273 : vector<16x16xf32>
    %c25 = arith.constant 25 : index
    %275 = memref.load %arg1[%c25] : memref<98xf32, #tpu.memory_space<smem>>
    %c0_240 = arith.constant 0 : index
    %c4_241 = arith.constant 4 : index
    %c3_242 = arith.constant 3 : index
    %c0_243 = arith.constant 0 : index
    %276 = vector.load %arg6[%c0_240, %c4_241, %c3_242, %c0_243] : memref<2x7x22x16xf32, #tpu.memory_space<vmem>>, vector<1x1x16x16xf32>
    %277 = vector.shape_cast %276 : vector<1x1x16x16xf32> to vector<16x16xf32>
    %278 = vector.broadcast %275 : f32 to vector<16x16xf32>
    %279 = arith.mulf %278, %277 : vector<16x16xf32>
    %280 = arith.addf %256, %279 : vector<16x16xf32>
    %c32 = arith.constant 32 : index
    %281 = memref.load %arg1[%c32] : memref<98xf32, #tpu.memory_space<smem>>
    %c0_244 = arith.constant 0 : index
    %c4_245 = arith.constant 4 : index
    %c4_246 = arith.constant 4 : index
    %c0_247 = arith.constant 0 : index
    %282 = vector.load %arg6[%c0_244, %c4_245, %c4_246, %c0_247] : memref<2x7x22x16xf32, #tpu.memory_space<vmem>>, vector<1x1x16x16xf32>
    %283 = vector.shape_cast %282 : vector<1x1x16x16xf32> to vector<16x16xf32>
    %284 = vector.broadcast %281 : f32 to vector<16x16xf32>
    %285 = arith.mulf %284, %283 : vector<16x16xf32>
    %286 = arith.addf %262, %285 : vector<16x16xf32>
    %c39 = arith.constant 39 : index
    %287 = memref.load %arg1[%c39] : memref<98xf32, #tpu.memory_space<smem>>
    %c0_248 = arith.constant 0 : index
    %c4_249 = arith.constant 4 : index
    %c5_250 = arith.constant 5 : index
    %c0_251 = arith.constant 0 : index
    %288 = vector.load %arg6[%c0_248, %c4_249, %c5_250, %c0_251] : memref<2x7x22x16xf32, #tpu.memory_space<vmem>>, vector<1x1x16x16xf32>
    %289 = vector.shape_cast %288 : vector<1x1x16x16xf32> to vector<16x16xf32>
    %290 = vector.broadcast %287 : f32 to vector<16x16xf32>
    %291 = arith.mulf %290, %289 : vector<16x16xf32>
    %292 = arith.addf %268, %291 : vector<16x16xf32>
    %c46 = arith.constant 46 : index
    %293 = memref.load %arg1[%c46] : memref<98xf32, #tpu.memory_space<smem>>
    %c0_252 = arith.constant 0 : index
    %c4_253 = arith.constant 4 : index
    %c6_254 = arith.constant 6 : index
    %c0_255 = arith.constant 0 : index
    %294 = vector.load %arg6[%c0_252, %c4_253, %c6_254, %c0_255] : memref<2x7x22x16xf32, #tpu.memory_space<vmem>>, vector<1x1x16x16xf32>
    %295 = vector.shape_cast %294 : vector<1x1x16x16xf32> to vector<16x16xf32>
    %296 = vector.broadcast %293 : f32 to vector<16x16xf32>
    %297 = arith.mulf %296, %295 : vector<16x16xf32>
    %298 = arith.addf %274, %297 : vector<16x16xf32>
    %c5_256 = arith.constant 5 : index
    %299 = memref.load %arg1[%c5_256] : memref<98xf32, #tpu.memory_space<smem>>
    %c0_257 = arith.constant 0 : index
    %c5_258 = arith.constant 5 : index
    %c0_259 = arith.constant 0 : index
    %c0_260 = arith.constant 0 : index
    %300 = vector.load %arg6[%c0_257, %c5_258, %c0_259, %c0_260] : memref<2x7x22x16xf32, #tpu.memory_space<vmem>>, vector<1x1x16x16xf32>
    %301 = vector.shape_cast %300 : vector<1x1x16x16xf32> to vector<16x16xf32>
    %302 = vector.broadcast %299 : f32 to vector<16x16xf32>
    %303 = arith.mulf %302, %301 : vector<16x16xf32>
    %304 = arith.addf %280, %303 : vector<16x16xf32>
    %c12 = arith.constant 12 : index
    %305 = memref.load %arg1[%c12] : memref<98xf32, #tpu.memory_space<smem>>
    %c0_261 = arith.constant 0 : index
    %c5_262 = arith.constant 5 : index
    %c1_263 = arith.constant 1 : index
    %c0_264 = arith.constant 0 : index
    %306 = vector.load %arg6[%c0_261, %c5_262, %c1_263, %c0_264] : memref<2x7x22x16xf32, #tpu.memory_space<vmem>>, vector<1x1x16x16xf32>
    %307 = vector.shape_cast %306 : vector<1x1x16x16xf32> to vector<16x16xf32>
    %308 = vector.broadcast %305 : f32 to vector<16x16xf32>
    %309 = arith.mulf %308, %307 : vector<16x16xf32>
    %310 = arith.addf %286, %309 : vector<16x16xf32>
    %c19 = arith.constant 19 : index
    %311 = memref.load %arg1[%c19] : memref<98xf32, #tpu.memory_space<smem>>
    %c0_265 = arith.constant 0 : index
    %c5_266 = arith.constant 5 : index
    %c2_267 = arith.constant 2 : index
    %c0_268 = arith.constant 0 : index
    %312 = vector.load %arg6[%c0_265, %c5_266, %c2_267, %c0_268] : memref<2x7x22x16xf32, #tpu.memory_space<vmem>>, vector<1x1x16x16xf32>
    %313 = vector.shape_cast %312 : vector<1x1x16x16xf32> to vector<16x16xf32>
    %314 = vector.broadcast %311 : f32 to vector<16x16xf32>
    %315 = arith.mulf %314, %313 : vector<16x16xf32>
    %316 = arith.addf %292, %315 : vector<16x16xf32>
    %c26 = arith.constant 26 : index
    %317 = memref.load %arg1[%c26] : memref<98xf32, #tpu.memory_space<smem>>
    %c0_269 = arith.constant 0 : index
    %c5_270 = arith.constant 5 : index
    %c3_271 = arith.constant 3 : index
    %c0_272 = arith.constant 0 : index
    %318 = vector.load %arg6[%c0_269, %c5_270, %c3_271, %c0_272] : memref<2x7x22x16xf32, #tpu.memory_space<vmem>>, vector<1x1x16x16xf32>
    %319 = vector.shape_cast %318 : vector<1x1x16x16xf32> to vector<16x16xf32>
    %320 = vector.broadcast %317 : f32 to vector<16x16xf32>
    %321 = arith.mulf %320, %319 : vector<16x16xf32>
    %322 = arith.addf %298, %321 : vector<16x16xf32>
    %c33 = arith.constant 33 : index
    %323 = memref.load %arg1[%c33] : memref<98xf32, #tpu.memory_space<smem>>
    %c0_273 = arith.constant 0 : index
    %c5_274 = arith.constant 5 : index
    %c4_275 = arith.constant 4 : index
    %c0_276 = arith.constant 0 : index
    %324 = vector.load %arg6[%c0_273, %c5_274, %c4_275, %c0_276] : memref<2x7x22x16xf32, #tpu.memory_space<vmem>>, vector<1x1x16x16xf32>
    %325 = vector.shape_cast %324 : vector<1x1x16x16xf32> to vector<16x16xf32>
    %326 = vector.broadcast %323 : f32 to vector<16x16xf32>
    %327 = arith.mulf %326, %325 : vector<16x16xf32>
    %328 = arith.addf %304, %327 : vector<16x16xf32>
    %c40 = arith.constant 40 : index
    %329 = memref.load %arg1[%c40] : memref<98xf32, #tpu.memory_space<smem>>
    %c0_277 = arith.constant 0 : index
    %c5_278 = arith.constant 5 : index
    %c5_279 = arith.constant 5 : index
    %c0_280 = arith.constant 0 : index
    %330 = vector.load %arg6[%c0_277, %c5_278, %c5_279, %c0_280] : memref<2x7x22x16xf32, #tpu.memory_space<vmem>>, vector<1x1x16x16xf32>
    %331 = vector.shape_cast %330 : vector<1x1x16x16xf32> to vector<16x16xf32>
    %332 = vector.broadcast %329 : f32 to vector<16x16xf32>
    %333 = arith.mulf %332, %331 : vector<16x16xf32>
    %334 = arith.addf %310, %333 : vector<16x16xf32>
    %c47 = arith.constant 47 : index
    %335 = memref.load %arg1[%c47] : memref<98xf32, #tpu.memory_space<smem>>
    %c0_281 = arith.constant 0 : index
    %c5_282 = arith.constant 5 : index
    %c6_283 = arith.constant 6 : index
    %c0_284 = arith.constant 0 : index
    %336 = vector.load %arg6[%c0_281, %c5_282, %c6_283, %c0_284] : memref<2x7x22x16xf32, #tpu.memory_space<vmem>>, vector<1x1x16x16xf32>
    %337 = vector.shape_cast %336 : vector<1x1x16x16xf32> to vector<16x16xf32>
    %338 = vector.broadcast %335 : f32 to vector<16x16xf32>
    %339 = arith.mulf %338, %337 : vector<16x16xf32>
    %340 = arith.addf %316, %339 : vector<16x16xf32>
    %c6_285 = arith.constant 6 : index
    %341 = memref.load %arg1[%c6_285] : memref<98xf32, #tpu.memory_space<smem>>
    %c0_286 = arith.constant 0 : index
    %c6_287 = arith.constant 6 : index
    %c0_288 = arith.constant 0 : index
    %c0_289 = arith.constant 0 : index
    %342 = vector.load %arg6[%c0_286, %c6_287, %c0_288, %c0_289] : memref<2x7x22x16xf32, #tpu.memory_space<vmem>>, vector<1x1x16x16xf32>
    %343 = vector.shape_cast %342 : vector<1x1x16x16xf32> to vector<16x16xf32>
    %344 = vector.broadcast %341 : f32 to vector<16x16xf32>
    %345 = arith.mulf %344, %343 : vector<16x16xf32>
    %346 = arith.addf %322, %345 : vector<16x16xf32>
    %c13 = arith.constant 13 : index
    %347 = memref.load %arg1[%c13] : memref<98xf32, #tpu.memory_space<smem>>
    %c0_290 = arith.constant 0 : index
    %c6_291 = arith.constant 6 : index
    %c1_292 = arith.constant 1 : index
    %c0_293 = arith.constant 0 : index
    %348 = vector.load %arg6[%c0_290, %c6_291, %c1_292, %c0_293] : memref<2x7x22x16xf32, #tpu.memory_space<vmem>>, vector<1x1x16x16xf32>
    %349 = vector.shape_cast %348 : vector<1x1x16x16xf32> to vector<16x16xf32>
    %350 = vector.broadcast %347 : f32 to vector<16x16xf32>
    %351 = arith.mulf %350, %349 : vector<16x16xf32>
    %352 = arith.addf %328, %351 : vector<16x16xf32>
    %c20 = arith.constant 20 : index
    %353 = memref.load %arg1[%c20] : memref<98xf32, #tpu.memory_space<smem>>
    %c0_294 = arith.constant 0 : index
    %c6_295 = arith.constant 6 : index
    %c2_296 = arith.constant 2 : index
    %c0_297 = arith.constant 0 : index
    %354 = vector.load %arg6[%c0_294, %c6_295, %c2_296, %c0_297] : memref<2x7x22x16xf32, #tpu.memory_space<vmem>>, vector<1x1x16x16xf32>
    %355 = vector.shape_cast %354 : vector<1x1x16x16xf32> to vector<16x16xf32>
    %356 = vector.broadcast %353 : f32 to vector<16x16xf32>
    %357 = arith.mulf %356, %355 : vector<16x16xf32>
    %358 = arith.addf %334, %357 : vector<16x16xf32>
    %c27 = arith.constant 27 : index
    %359 = memref.load %arg1[%c27] : memref<98xf32, #tpu.memory_space<smem>>
    %c0_298 = arith.constant 0 : index
    %c6_299 = arith.constant 6 : index
    %c3_300 = arith.constant 3 : index
    %c0_301 = arith.constant 0 : index
    %360 = vector.load %arg6[%c0_298, %c6_299, %c3_300, %c0_301] : memref<2x7x22x16xf32, #tpu.memory_space<vmem>>, vector<1x1x16x16xf32>
    %361 = vector.shape_cast %360 : vector<1x1x16x16xf32> to vector<16x16xf32>
    %362 = vector.broadcast %359 : f32 to vector<16x16xf32>
    %363 = arith.mulf %362, %361 : vector<16x16xf32>
    %364 = arith.addf %340, %363 : vector<16x16xf32>
    %c34 = arith.constant 34 : index
    %365 = memref.load %arg1[%c34] : memref<98xf32, #tpu.memory_space<smem>>
    %c0_302 = arith.constant 0 : index
    %c6_303 = arith.constant 6 : index
    %c4_304 = arith.constant 4 : index
    %c0_305 = arith.constant 0 : index
    %366 = vector.load %arg6[%c0_302, %c6_303, %c4_304, %c0_305] : memref<2x7x22x16xf32, #tpu.memory_space<vmem>>, vector<1x1x16x16xf32>
    %367 = vector.shape_cast %366 : vector<1x1x16x16xf32> to vector<16x16xf32>
    %368 = vector.broadcast %365 : f32 to vector<16x16xf32>
    %369 = arith.mulf %368, %367 : vector<16x16xf32>
    %370 = arith.addf %346, %369 : vector<16x16xf32>
    %c41 = arith.constant 41 : index
    %371 = memref.load %arg1[%c41] : memref<98xf32, #tpu.memory_space<smem>>
    %c0_306 = arith.constant 0 : index
    %c6_307 = arith.constant 6 : index
    %c5_308 = arith.constant 5 : index
    %c0_309 = arith.constant 0 : index
    %372 = vector.load %arg6[%c0_306, %c6_307, %c5_308, %c0_309] : memref<2x7x22x16xf32, #tpu.memory_space<vmem>>, vector<1x1x16x16xf32>
    %373 = vector.shape_cast %372 : vector<1x1x16x16xf32> to vector<16x16xf32>
    %374 = vector.broadcast %371 : f32 to vector<16x16xf32>
    %375 = arith.mulf %374, %373 : vector<16x16xf32>
    %376 = arith.addf %352, %375 : vector<16x16xf32>
    %c48 = arith.constant 48 : index
    %377 = memref.load %arg1[%c48] : memref<98xf32, #tpu.memory_space<smem>>
    %c0_310 = arith.constant 0 : index
    %c6_311 = arith.constant 6 : index
    %c6_312 = arith.constant 6 : index
    %c0_313 = arith.constant 0 : index
    %378 = vector.load %arg6[%c0_310, %c6_311, %c6_312, %c0_313] : memref<2x7x22x16xf32, #tpu.memory_space<vmem>>, vector<1x1x16x16xf32>
    %379 = vector.shape_cast %378 : vector<1x1x16x16xf32> to vector<16x16xf32>
    %380 = vector.broadcast %377 : f32 to vector<16x16xf32>
    %381 = arith.mulf %380, %379 : vector<16x16xf32>
    %382 = arith.addf %358, %381 : vector<16x16xf32>
    %c49 = arith.constant 49 : index
    %383 = memref.load %arg1[%c49] : memref<98xf32, #tpu.memory_space<smem>>
    %c1_314 = arith.constant 1 : index
    %c0_315 = arith.constant 0 : index
    %c0_316 = arith.constant 0 : index
    %c0_317 = arith.constant 0 : index
    %384 = vector.load %arg6[%c1_314, %c0_315, %c0_316, %c0_317] : memref<2x7x22x16xf32, #tpu.memory_space<vmem>>, vector<1x1x16x16xf32>
    %385 = vector.shape_cast %384 : vector<1x1x16x16xf32> to vector<16x16xf32>
    %386 = vector.broadcast %383 : f32 to vector<16x16xf32>
    %387 = arith.mulf %386, %385 : vector<16x16xf32>
    %388 = arith.addf %364, %387 : vector<16x16xf32>
    %c56 = arith.constant 56 : index
    %389 = memref.load %arg1[%c56] : memref<98xf32, #tpu.memory_space<smem>>
    %c1_318 = arith.constant 1 : index
    %c0_319 = arith.constant 0 : index
    %c1_320 = arith.constant 1 : index
    %c0_321 = arith.constant 0 : index
    %390 = vector.load %arg6[%c1_318, %c0_319, %c1_320, %c0_321] : memref<2x7x22x16xf32, #tpu.memory_space<vmem>>, vector<1x1x16x16xf32>
    %391 = vector.shape_cast %390 : vector<1x1x16x16xf32> to vector<16x16xf32>
    %392 = vector.broadcast %389 : f32 to vector<16x16xf32>
    %393 = arith.mulf %392, %391 : vector<16x16xf32>
    %394 = arith.addf %370, %393 : vector<16x16xf32>
    %c63 = arith.constant 63 : index
    %395 = memref.load %arg1[%c63] : memref<98xf32, #tpu.memory_space<smem>>
    %c1_322 = arith.constant 1 : index
    %c0_323 = arith.constant 0 : index
    %c2_324 = arith.constant 2 : index
    %c0_325 = arith.constant 0 : index
    %396 = vector.load %arg6[%c1_322, %c0_323, %c2_324, %c0_325] : memref<2x7x22x16xf32, #tpu.memory_space<vmem>>, vector<1x1x16x16xf32>
    %397 = vector.shape_cast %396 : vector<1x1x16x16xf32> to vector<16x16xf32>
    %398 = vector.broadcast %395 : f32 to vector<16x16xf32>
    %399 = arith.mulf %398, %397 : vector<16x16xf32>
    %400 = arith.addf %376, %399 : vector<16x16xf32>
    %c70 = arith.constant 70 : index
    %401 = memref.load %arg1[%c70] : memref<98xf32, #tpu.memory_space<smem>>
    %c1_326 = arith.constant 1 : index
    %c0_327 = arith.constant 0 : index
    %c3_328 = arith.constant 3 : index
    %c0_329 = arith.constant 0 : index
    %402 = vector.load %arg6[%c1_326, %c0_327, %c3_328, %c0_329] : memref<2x7x22x16xf32, #tpu.memory_space<vmem>>, vector<1x1x16x16xf32>
    %403 = vector.shape_cast %402 : vector<1x1x16x16xf32> to vector<16x16xf32>
    %404 = vector.broadcast %401 : f32 to vector<16x16xf32>
    %405 = arith.mulf %404, %403 : vector<16x16xf32>
    %406 = arith.addf %382, %405 : vector<16x16xf32>
    %c77 = arith.constant 77 : index
    %407 = memref.load %arg1[%c77] : memref<98xf32, #tpu.memory_space<smem>>
    %c1_330 = arith.constant 1 : index
    %c0_331 = arith.constant 0 : index
    %c4_332 = arith.constant 4 : index
    %c0_333 = arith.constant 0 : index
    %408 = vector.load %arg6[%c1_330, %c0_331, %c4_332, %c0_333] : memref<2x7x22x16xf32, #tpu.memory_space<vmem>>, vector<1x1x16x16xf32>
    %409 = vector.shape_cast %408 : vector<1x1x16x16xf32> to vector<16x16xf32>
    %410 = vector.broadcast %407 : f32 to vector<16x16xf32>
    %411 = arith.mulf %410, %409 : vector<16x16xf32>
    %412 = arith.addf %388, %411 : vector<16x16xf32>
    %c84 = arith.constant 84 : index
    %413 = memref.load %arg1[%c84] : memref<98xf32, #tpu.memory_space<smem>>
    %c1_334 = arith.constant 1 : index
    %c0_335 = arith.constant 0 : index
    %c5_336 = arith.constant 5 : index
    %c0_337 = arith.constant 0 : index
    %414 = vector.load %arg6[%c1_334, %c0_335, %c5_336, %c0_337] : memref<2x7x22x16xf32, #tpu.memory_space<vmem>>, vector<1x1x16x16xf32>
    %415 = vector.shape_cast %414 : vector<1x1x16x16xf32> to vector<16x16xf32>
    %416 = vector.broadcast %413 : f32 to vector<16x16xf32>
    %417 = arith.mulf %416, %415 : vector<16x16xf32>
    %418 = arith.addf %394, %417 : vector<16x16xf32>
    %c91 = arith.constant 91 : index
    %419 = memref.load %arg1[%c91] : memref<98xf32, #tpu.memory_space<smem>>
    %c1_338 = arith.constant 1 : index
    %c0_339 = arith.constant 0 : index
    %c6_340 = arith.constant 6 : index
    %c0_341 = arith.constant 0 : index
    %420 = vector.load %arg6[%c1_338, %c0_339, %c6_340, %c0_341] : memref<2x7x22x16xf32, #tpu.memory_space<vmem>>, vector<1x1x16x16xf32>
    %421 = vector.shape_cast %420 : vector<1x1x16x16xf32> to vector<16x16xf32>
    %422 = vector.broadcast %419 : f32 to vector<16x16xf32>
    %423 = arith.mulf %422, %421 : vector<16x16xf32>
    %424 = arith.addf %400, %423 : vector<16x16xf32>
    %c50 = arith.constant 50 : index
    %425 = memref.load %arg1[%c50] : memref<98xf32, #tpu.memory_space<smem>>
    %c1_342 = arith.constant 1 : index
    %c1_343 = arith.constant 1 : index
    %c0_344 = arith.constant 0 : index
    %c0_345 = arith.constant 0 : index
    %426 = vector.load %arg6[%c1_342, %c1_343, %c0_344, %c0_345] : memref<2x7x22x16xf32, #tpu.memory_space<vmem>>, vector<1x1x16x16xf32>
    %427 = vector.shape_cast %426 : vector<1x1x16x16xf32> to vector<16x16xf32>
    %428 = vector.broadcast %425 : f32 to vector<16x16xf32>
    %429 = arith.mulf %428, %427 : vector<16x16xf32>
    %430 = arith.addf %406, %429 : vector<16x16xf32>
    %c57 = arith.constant 57 : index
    %431 = memref.load %arg1[%c57] : memref<98xf32, #tpu.memory_space<smem>>
    %c1_346 = arith.constant 1 : index
    %c1_347 = arith.constant 1 : index
    %c1_348 = arith.constant 1 : index
    %c0_349 = arith.constant 0 : index
    %432 = vector.load %arg6[%c1_346, %c1_347, %c1_348, %c0_349] : memref<2x7x22x16xf32, #tpu.memory_space<vmem>>, vector<1x1x16x16xf32>
    %433 = vector.shape_cast %432 : vector<1x1x16x16xf32> to vector<16x16xf32>
    %434 = vector.broadcast %431 : f32 to vector<16x16xf32>
    %435 = arith.mulf %434, %433 : vector<16x16xf32>
    %436 = arith.addf %412, %435 : vector<16x16xf32>
    %c64 = arith.constant 64 : index
    %437 = memref.load %arg1[%c64] : memref<98xf32, #tpu.memory_space<smem>>
    %c1_350 = arith.constant 1 : index
    %c1_351 = arith.constant 1 : index
    %c2_352 = arith.constant 2 : index
    %c0_353 = arith.constant 0 : index
    %438 = vector.load %arg6[%c1_350, %c1_351, %c2_352, %c0_353] : memref<2x7x22x16xf32, #tpu.memory_space<vmem>>, vector<1x1x16x16xf32>
    %439 = vector.shape_cast %438 : vector<1x1x16x16xf32> to vector<16x16xf32>
    %440 = vector.broadcast %437 : f32 to vector<16x16xf32>
    %441 = arith.mulf %440, %439 : vector<16x16xf32>
    %442 = arith.addf %418, %441 : vector<16x16xf32>
    %c71 = arith.constant 71 : index
    %443 = memref.load %arg1[%c71] : memref<98xf32, #tpu.memory_space<smem>>
    %c1_354 = arith.constant 1 : index
    %c1_355 = arith.constant 1 : index
    %c3_356 = arith.constant 3 : index
    %c0_357 = arith.constant 0 : index
    %444 = vector.load %arg6[%c1_354, %c1_355, %c3_356, %c0_357] : memref<2x7x22x16xf32, #tpu.memory_space<vmem>>, vector<1x1x16x16xf32>
    %445 = vector.shape_cast %444 : vector<1x1x16x16xf32> to vector<16x16xf32>
    %446 = vector.broadcast %443 : f32 to vector<16x16xf32>
    %447 = arith.mulf %446, %445 : vector<16x16xf32>
    %448 = arith.addf %424, %447 : vector<16x16xf32>
    %c78 = arith.constant 78 : index
    %449 = memref.load %arg1[%c78] : memref<98xf32, #tpu.memory_space<smem>>
    %c1_358 = arith.constant 1 : index
    %c1_359 = arith.constant 1 : index
    %c4_360 = arith.constant 4 : index
    %c0_361 = arith.constant 0 : index
    %450 = vector.load %arg6[%c1_358, %c1_359, %c4_360, %c0_361] : memref<2x7x22x16xf32, #tpu.memory_space<vmem>>, vector<1x1x16x16xf32>
    %451 = vector.shape_cast %450 : vector<1x1x16x16xf32> to vector<16x16xf32>
    %452 = vector.broadcast %449 : f32 to vector<16x16xf32>
    %453 = arith.mulf %452, %451 : vector<16x16xf32>
    %454 = arith.addf %430, %453 : vector<16x16xf32>
    %c85 = arith.constant 85 : index
    %455 = memref.load %arg1[%c85] : memref<98xf32, #tpu.memory_space<smem>>
    %c1_362 = arith.constant 1 : index
    %c1_363 = arith.constant 1 : index
    %c5_364 = arith.constant 5 : index
    %c0_365 = arith.constant 0 : index
    %456 = vector.load %arg6[%c1_362, %c1_363, %c5_364, %c0_365] : memref<2x7x22x16xf32, #tpu.memory_space<vmem>>, vector<1x1x16x16xf32>
    %457 = vector.shape_cast %456 : vector<1x1x16x16xf32> to vector<16x16xf32>
    %458 = vector.broadcast %455 : f32 to vector<16x16xf32>
    %459 = arith.mulf %458, %457 : vector<16x16xf32>
    %460 = arith.addf %436, %459 : vector<16x16xf32>
    %c92 = arith.constant 92 : index
    %461 = memref.load %arg1[%c92] : memref<98xf32, #tpu.memory_space<smem>>
    %c1_366 = arith.constant 1 : index
    %c1_367 = arith.constant 1 : index
    %c6_368 = arith.constant 6 : index
    %c0_369 = arith.constant 0 : index
    %462 = vector.load %arg6[%c1_366, %c1_367, %c6_368, %c0_369] : memref<2x7x22x16xf32, #tpu.memory_space<vmem>>, vector<1x1x16x16xf32>
    %463 = vector.shape_cast %462 : vector<1x1x16x16xf32> to vector<16x16xf32>
    %464 = vector.broadcast %461 : f32 to vector<16x16xf32>
    %465 = arith.mulf %464, %463 : vector<16x16xf32>
    %466 = arith.addf %442, %465 : vector<16x16xf32>
    %c51 = arith.constant 51 : index
    %467 = memref.load %arg1[%c51] : memref<98xf32, #tpu.memory_space<smem>>
    %c1_370 = arith.constant 1 : index
    %c2_371 = arith.constant 2 : index
    %c0_372 = arith.constant 0 : index
    %c0_373 = arith.constant 0 : index
    %468 = vector.load %arg6[%c1_370, %c2_371, %c0_372, %c0_373] : memref<2x7x22x16xf32, #tpu.memory_space<vmem>>, vector<1x1x16x16xf32>
    %469 = vector.shape_cast %468 : vector<1x1x16x16xf32> to vector<16x16xf32>
    %470 = vector.broadcast %467 : f32 to vector<16x16xf32>
    %471 = arith.mulf %470, %469 : vector<16x16xf32>
    %472 = arith.addf %448, %471 : vector<16x16xf32>
    %c58 = arith.constant 58 : index
    %473 = memref.load %arg1[%c58] : memref<98xf32, #tpu.memory_space<smem>>
    %c1_374 = arith.constant 1 : index
    %c2_375 = arith.constant 2 : index
    %c1_376 = arith.constant 1 : index
    %c0_377 = arith.constant 0 : index
    %474 = vector.load %arg6[%c1_374, %c2_375, %c1_376, %c0_377] : memref<2x7x22x16xf32, #tpu.memory_space<vmem>>, vector<1x1x16x16xf32>
    %475 = vector.shape_cast %474 : vector<1x1x16x16xf32> to vector<16x16xf32>
    %476 = vector.broadcast %473 : f32 to vector<16x16xf32>
    %477 = arith.mulf %476, %475 : vector<16x16xf32>
    %478 = arith.addf %454, %477 : vector<16x16xf32>
    %c65 = arith.constant 65 : index
    %479 = memref.load %arg1[%c65] : memref<98xf32, #tpu.memory_space<smem>>
    %c1_378 = arith.constant 1 : index
    %c2_379 = arith.constant 2 : index
    %c2_380 = arith.constant 2 : index
    %c0_381 = arith.constant 0 : index
    %480 = vector.load %arg6[%c1_378, %c2_379, %c2_380, %c0_381] : memref<2x7x22x16xf32, #tpu.memory_space<vmem>>, vector<1x1x16x16xf32>
    %481 = vector.shape_cast %480 : vector<1x1x16x16xf32> to vector<16x16xf32>
    %482 = vector.broadcast %479 : f32 to vector<16x16xf32>
    %483 = arith.mulf %482, %481 : vector<16x16xf32>
    %484 = arith.addf %460, %483 : vector<16x16xf32>
    %c72 = arith.constant 72 : index
    %485 = memref.load %arg1[%c72] : memref<98xf32, #tpu.memory_space<smem>>
    %c1_382 = arith.constant 1 : index
    %c2_383 = arith.constant 2 : index
    %c3_384 = arith.constant 3 : index
    %c0_385 = arith.constant 0 : index
    %486 = vector.load %arg6[%c1_382, %c2_383, %c3_384, %c0_385] : memref<2x7x22x16xf32, #tpu.memory_space<vmem>>, vector<1x1x16x16xf32>
    %487 = vector.shape_cast %486 : vector<1x1x16x16xf32> to vector<16x16xf32>
    %488 = vector.broadcast %485 : f32 to vector<16x16xf32>
    %489 = arith.mulf %488, %487 : vector<16x16xf32>
    %490 = arith.addf %466, %489 : vector<16x16xf32>
    %c79 = arith.constant 79 : index
    %491 = memref.load %arg1[%c79] : memref<98xf32, #tpu.memory_space<smem>>
    %c1_386 = arith.constant 1 : index
    %c2_387 = arith.constant 2 : index
    %c4_388 = arith.constant 4 : index
    %c0_389 = arith.constant 0 : index
    %492 = vector.load %arg6[%c1_386, %c2_387, %c4_388, %c0_389] : memref<2x7x22x16xf32, #tpu.memory_space<vmem>>, vector<1x1x16x16xf32>
    %493 = vector.shape_cast %492 : vector<1x1x16x16xf32> to vector<16x16xf32>
    %494 = vector.broadcast %491 : f32 to vector<16x16xf32>
    %495 = arith.mulf %494, %493 : vector<16x16xf32>
    %496 = arith.addf %472, %495 : vector<16x16xf32>
    %c86 = arith.constant 86 : index
    %497 = memref.load %arg1[%c86] : memref<98xf32, #tpu.memory_space<smem>>
    %c1_390 = arith.constant 1 : index
    %c2_391 = arith.constant 2 : index
    %c5_392 = arith.constant 5 : index
    %c0_393 = arith.constant 0 : index
    %498 = vector.load %arg6[%c1_390, %c2_391, %c5_392, %c0_393] : memref<2x7x22x16xf32, #tpu.memory_space<vmem>>, vector<1x1x16x16xf32>
    %499 = vector.shape_cast %498 : vector<1x1x16x16xf32> to vector<16x16xf32>
    %500 = vector.broadcast %497 : f32 to vector<16x16xf32>
    %501 = arith.mulf %500, %499 : vector<16x16xf32>
    %502 = arith.addf %478, %501 : vector<16x16xf32>
    %c93 = arith.constant 93 : index
    %503 = memref.load %arg1[%c93] : memref<98xf32, #tpu.memory_space<smem>>
    %c1_394 = arith.constant 1 : index
    %c2_395 = arith.constant 2 : index
    %c6_396 = arith.constant 6 : index
    %c0_397 = arith.constant 0 : index
    %504 = vector.load %arg6[%c1_394, %c2_395, %c6_396, %c0_397] : memref<2x7x22x16xf32, #tpu.memory_space<vmem>>, vector<1x1x16x16xf32>
    %505 = vector.shape_cast %504 : vector<1x1x16x16xf32> to vector<16x16xf32>
    %506 = vector.broadcast %503 : f32 to vector<16x16xf32>
    %507 = arith.mulf %506, %505 : vector<16x16xf32>
    %508 = arith.addf %484, %507 : vector<16x16xf32>
    %c52 = arith.constant 52 : index
    %509 = memref.load %arg1[%c52] : memref<98xf32, #tpu.memory_space<smem>>
    %c1_398 = arith.constant 1 : index
    %c3_399 = arith.constant 3 : index
    %c0_400 = arith.constant 0 : index
    %c0_401 = arith.constant 0 : index
    %510 = vector.load %arg6[%c1_398, %c3_399, %c0_400, %c0_401] : memref<2x7x22x16xf32, #tpu.memory_space<vmem>>, vector<1x1x16x16xf32>
    %511 = vector.shape_cast %510 : vector<1x1x16x16xf32> to vector<16x16xf32>
    %512 = vector.broadcast %509 : f32 to vector<16x16xf32>
    %513 = arith.mulf %512, %511 : vector<16x16xf32>
    %514 = arith.addf %490, %513 : vector<16x16xf32>
    %c59 = arith.constant 59 : index
    %515 = memref.load %arg1[%c59] : memref<98xf32, #tpu.memory_space<smem>>
    %c1_402 = arith.constant 1 : index
    %c3_403 = arith.constant 3 : index
    %c1_404 = arith.constant 1 : index
    %c0_405 = arith.constant 0 : index
    %516 = vector.load %arg6[%c1_402, %c3_403, %c1_404, %c0_405] : memref<2x7x22x16xf32, #tpu.memory_space<vmem>>, vector<1x1x16x16xf32>
    %517 = vector.shape_cast %516 : vector<1x1x16x16xf32> to vector<16x16xf32>
    %518 = vector.broadcast %515 : f32 to vector<16x16xf32>
    %519 = arith.mulf %518, %517 : vector<16x16xf32>
    %520 = arith.addf %496, %519 : vector<16x16xf32>
    %c66 = arith.constant 66 : index
    %521 = memref.load %arg1[%c66] : memref<98xf32, #tpu.memory_space<smem>>
    %c1_406 = arith.constant 1 : index
    %c3_407 = arith.constant 3 : index
    %c2_408 = arith.constant 2 : index
    %c0_409 = arith.constant 0 : index
    %522 = vector.load %arg6[%c1_406, %c3_407, %c2_408, %c0_409] : memref<2x7x22x16xf32, #tpu.memory_space<vmem>>, vector<1x1x16x16xf32>
    %523 = vector.shape_cast %522 : vector<1x1x16x16xf32> to vector<16x16xf32>
    %524 = vector.broadcast %521 : f32 to vector<16x16xf32>
    %525 = arith.mulf %524, %523 : vector<16x16xf32>
    %526 = arith.addf %502, %525 : vector<16x16xf32>
    %c73 = arith.constant 73 : index
    %527 = memref.load %arg1[%c73] : memref<98xf32, #tpu.memory_space<smem>>
    %c1_410 = arith.constant 1 : index
    %c3_411 = arith.constant 3 : index
    %c3_412 = arith.constant 3 : index
    %c0_413 = arith.constant 0 : index
    %528 = vector.load %arg6[%c1_410, %c3_411, %c3_412, %c0_413] : memref<2x7x22x16xf32, #tpu.memory_space<vmem>>, vector<1x1x16x16xf32>
    %529 = vector.shape_cast %528 : vector<1x1x16x16xf32> to vector<16x16xf32>
    %530 = vector.broadcast %527 : f32 to vector<16x16xf32>
    %531 = arith.mulf %530, %529 : vector<16x16xf32>
    %532 = arith.addf %508, %531 : vector<16x16xf32>
    %c80 = arith.constant 80 : index
    %533 = memref.load %arg1[%c80] : memref<98xf32, #tpu.memory_space<smem>>
    %c1_414 = arith.constant 1 : index
    %c3_415 = arith.constant 3 : index
    %c4_416 = arith.constant 4 : index
    %c0_417 = arith.constant 0 : index
    %534 = vector.load %arg6[%c1_414, %c3_415, %c4_416, %c0_417] : memref<2x7x22x16xf32, #tpu.memory_space<vmem>>, vector<1x1x16x16xf32>
    %535 = vector.shape_cast %534 : vector<1x1x16x16xf32> to vector<16x16xf32>
    %536 = vector.broadcast %533 : f32 to vector<16x16xf32>
    %537 = arith.mulf %536, %535 : vector<16x16xf32>
    %538 = arith.addf %514, %537 : vector<16x16xf32>
    %c87 = arith.constant 87 : index
    %539 = memref.load %arg1[%c87] : memref<98xf32, #tpu.memory_space<smem>>
    %c1_418 = arith.constant 1 : index
    %c3_419 = arith.constant 3 : index
    %c5_420 = arith.constant 5 : index
    %c0_421 = arith.constant 0 : index
    %540 = vector.load %arg6[%c1_418, %c3_419, %c5_420, %c0_421] : memref<2x7x22x16xf32, #tpu.memory_space<vmem>>, vector<1x1x16x16xf32>
    %541 = vector.shape_cast %540 : vector<1x1x16x16xf32> to vector<16x16xf32>
    %542 = vector.broadcast %539 : f32 to vector<16x16xf32>
    %543 = arith.mulf %542, %541 : vector<16x16xf32>
    %544 = arith.addf %520, %543 : vector<16x16xf32>
    %c94 = arith.constant 94 : index
    %545 = memref.load %arg1[%c94] : memref<98xf32, #tpu.memory_space<smem>>
    %c1_422 = arith.constant 1 : index
    %c3_423 = arith.constant 3 : index
    %c6_424 = arith.constant 6 : index
    %c0_425 = arith.constant 0 : index
    %546 = vector.load %arg6[%c1_422, %c3_423, %c6_424, %c0_425] : memref<2x7x22x16xf32, #tpu.memory_space<vmem>>, vector<1x1x16x16xf32>
    %547 = vector.shape_cast %546 : vector<1x1x16x16xf32> to vector<16x16xf32>
    %548 = vector.broadcast %545 : f32 to vector<16x16xf32>
    %549 = arith.mulf %548, %547 : vector<16x16xf32>
    %550 = arith.addf %526, %549 : vector<16x16xf32>
    %c53 = arith.constant 53 : index
    %551 = memref.load %arg1[%c53] : memref<98xf32, #tpu.memory_space<smem>>
    %c1_426 = arith.constant 1 : index
    %c4_427 = arith.constant 4 : index
    %c0_428 = arith.constant 0 : index
    %c0_429 = arith.constant 0 : index
    %552 = vector.load %arg6[%c1_426, %c4_427, %c0_428, %c0_429] : memref<2x7x22x16xf32, #tpu.memory_space<vmem>>, vector<1x1x16x16xf32>
    %553 = vector.shape_cast %552 : vector<1x1x16x16xf32> to vector<16x16xf32>
    %554 = vector.broadcast %551 : f32 to vector<16x16xf32>
    %555 = arith.mulf %554, %553 : vector<16x16xf32>
    %556 = arith.addf %532, %555 : vector<16x16xf32>
    %c60 = arith.constant 60 : index
    %557 = memref.load %arg1[%c60] : memref<98xf32, #tpu.memory_space<smem>>
    %c1_430 = arith.constant 1 : index
    %c4_431 = arith.constant 4 : index
    %c1_432 = arith.constant 1 : index
    %c0_433 = arith.constant 0 : index
    %558 = vector.load %arg6[%c1_430, %c4_431, %c1_432, %c0_433] : memref<2x7x22x16xf32, #tpu.memory_space<vmem>>, vector<1x1x16x16xf32>
    %559 = vector.shape_cast %558 : vector<1x1x16x16xf32> to vector<16x16xf32>
    %560 = vector.broadcast %557 : f32 to vector<16x16xf32>
    %561 = arith.mulf %560, %559 : vector<16x16xf32>
    %562 = arith.addf %538, %561 : vector<16x16xf32>
    %c67 = arith.constant 67 : index
    %563 = memref.load %arg1[%c67] : memref<98xf32, #tpu.memory_space<smem>>
    %c1_434 = arith.constant 1 : index
    %c4_435 = arith.constant 4 : index
    %c2_436 = arith.constant 2 : index
    %c0_437 = arith.constant 0 : index
    %564 = vector.load %arg6[%c1_434, %c4_435, %c2_436, %c0_437] : memref<2x7x22x16xf32, #tpu.memory_space<vmem>>, vector<1x1x16x16xf32>
    %565 = vector.shape_cast %564 : vector<1x1x16x16xf32> to vector<16x16xf32>
    %566 = vector.broadcast %563 : f32 to vector<16x16xf32>
    %567 = arith.mulf %566, %565 : vector<16x16xf32>
    %568 = arith.addf %544, %567 : vector<16x16xf32>
    %c74 = arith.constant 74 : index
    %569 = memref.load %arg1[%c74] : memref<98xf32, #tpu.memory_space<smem>>
    %c1_438 = arith.constant 1 : index
    %c4_439 = arith.constant 4 : index
    %c3_440 = arith.constant 3 : index
    %c0_441 = arith.constant 0 : index
    %570 = vector.load %arg6[%c1_438, %c4_439, %c3_440, %c0_441] : memref<2x7x22x16xf32, #tpu.memory_space<vmem>>, vector<1x1x16x16xf32>
    %571 = vector.shape_cast %570 : vector<1x1x16x16xf32> to vector<16x16xf32>
    %572 = vector.broadcast %569 : f32 to vector<16x16xf32>
    %573 = arith.mulf %572, %571 : vector<16x16xf32>
    %574 = arith.addf %550, %573 : vector<16x16xf32>
    %c81 = arith.constant 81 : index
    %575 = memref.load %arg1[%c81] : memref<98xf32, #tpu.memory_space<smem>>
    %c1_442 = arith.constant 1 : index
    %c4_443 = arith.constant 4 : index
    %c4_444 = arith.constant 4 : index
    %c0_445 = arith.constant 0 : index
    %576 = vector.load %arg6[%c1_442, %c4_443, %c4_444, %c0_445] : memref<2x7x22x16xf32, #tpu.memory_space<vmem>>, vector<1x1x16x16xf32>
    %577 = vector.shape_cast %576 : vector<1x1x16x16xf32> to vector<16x16xf32>
    %578 = vector.broadcast %575 : f32 to vector<16x16xf32>
    %579 = arith.mulf %578, %577 : vector<16x16xf32>
    %580 = arith.addf %556, %579 : vector<16x16xf32>
    %c88 = arith.constant 88 : index
    %581 = memref.load %arg1[%c88] : memref<98xf32, #tpu.memory_space<smem>>
    %c1_446 = arith.constant 1 : index
    %c4_447 = arith.constant 4 : index
    %c5_448 = arith.constant 5 : index
    %c0_449 = arith.constant 0 : index
    %582 = vector.load %arg6[%c1_446, %c4_447, %c5_448, %c0_449] : memref<2x7x22x16xf32, #tpu.memory_space<vmem>>, vector<1x1x16x16xf32>
    %583 = vector.shape_cast %582 : vector<1x1x16x16xf32> to vector<16x16xf32>
    %584 = vector.broadcast %581 : f32 to vector<16x16xf32>
    %585 = arith.mulf %584, %583 : vector<16x16xf32>
    %586 = arith.addf %562, %585 : vector<16x16xf32>
    %c95 = arith.constant 95 : index
    %587 = memref.load %arg1[%c95] : memref<98xf32, #tpu.memory_space<smem>>
    %c1_450 = arith.constant 1 : index
    %c4_451 = arith.constant 4 : index
    %c6_452 = arith.constant 6 : index
    %c0_453 = arith.constant 0 : index
    %588 = vector.load %arg6[%c1_450, %c4_451, %c6_452, %c0_453] : memref<2x7x22x16xf32, #tpu.memory_space<vmem>>, vector<1x1x16x16xf32>
    %589 = vector.shape_cast %588 : vector<1x1x16x16xf32> to vector<16x16xf32>
    %590 = vector.broadcast %587 : f32 to vector<16x16xf32>
    %591 = arith.mulf %590, %589 : vector<16x16xf32>
    %592 = arith.addf %568, %591 : vector<16x16xf32>
    %c54 = arith.constant 54 : index
    %593 = memref.load %arg1[%c54] : memref<98xf32, #tpu.memory_space<smem>>
    %c1_454 = arith.constant 1 : index
    %c5_455 = arith.constant 5 : index
    %c0_456 = arith.constant 0 : index
    %c0_457 = arith.constant 0 : index
    %594 = vector.load %arg6[%c1_454, %c5_455, %c0_456, %c0_457] : memref<2x7x22x16xf32, #tpu.memory_space<vmem>>, vector<1x1x16x16xf32>
    %595 = vector.shape_cast %594 : vector<1x1x16x16xf32> to vector<16x16xf32>
    %596 = vector.broadcast %593 : f32 to vector<16x16xf32>
    %597 = arith.mulf %596, %595 : vector<16x16xf32>
    %598 = arith.addf %574, %597 : vector<16x16xf32>
    %c61 = arith.constant 61 : index
    %599 = memref.load %arg1[%c61] : memref<98xf32, #tpu.memory_space<smem>>
    %c1_458 = arith.constant 1 : index
    %c5_459 = arith.constant 5 : index
    %c1_460 = arith.constant 1 : index
    %c0_461 = arith.constant 0 : index
    %600 = vector.load %arg6[%c1_458, %c5_459, %c1_460, %c0_461] : memref<2x7x22x16xf32, #tpu.memory_space<vmem>>, vector<1x1x16x16xf32>
    %601 = vector.shape_cast %600 : vector<1x1x16x16xf32> to vector<16x16xf32>
    %602 = vector.broadcast %599 : f32 to vector<16x16xf32>
    %603 = arith.mulf %602, %601 : vector<16x16xf32>
    %604 = arith.addf %580, %603 : vector<16x16xf32>
    %c68 = arith.constant 68 : index
    %605 = memref.load %arg1[%c68] : memref<98xf32, #tpu.memory_space<smem>>
    %c1_462 = arith.constant 1 : index
    %c5_463 = arith.constant 5 : index
    %c2_464 = arith.constant 2 : index
    %c0_465 = arith.constant 0 : index
    %606 = vector.load %arg6[%c1_462, %c5_463, %c2_464, %c0_465] : memref<2x7x22x16xf32, #tpu.memory_space<vmem>>, vector<1x1x16x16xf32>
    %607 = vector.shape_cast %606 : vector<1x1x16x16xf32> to vector<16x16xf32>
    %608 = vector.broadcast %605 : f32 to vector<16x16xf32>
    %609 = arith.mulf %608, %607 : vector<16x16xf32>
    %610 = arith.addf %586, %609 : vector<16x16xf32>
    %c75 = arith.constant 75 : index
    %611 = memref.load %arg1[%c75] : memref<98xf32, #tpu.memory_space<smem>>
    %c1_466 = arith.constant 1 : index
    %c5_467 = arith.constant 5 : index
    %c3_468 = arith.constant 3 : index
    %c0_469 = arith.constant 0 : index
    %612 = vector.load %arg6[%c1_466, %c5_467, %c3_468, %c0_469] : memref<2x7x22x16xf32, #tpu.memory_space<vmem>>, vector<1x1x16x16xf32>
    %613 = vector.shape_cast %612 : vector<1x1x16x16xf32> to vector<16x16xf32>
    %614 = vector.broadcast %611 : f32 to vector<16x16xf32>
    %615 = arith.mulf %614, %613 : vector<16x16xf32>
    %616 = arith.addf %592, %615 : vector<16x16xf32>
    %c82 = arith.constant 82 : index
    %617 = memref.load %arg1[%c82] : memref<98xf32, #tpu.memory_space<smem>>
    %c1_470 = arith.constant 1 : index
    %c5_471 = arith.constant 5 : index
    %c4_472 = arith.constant 4 : index
    %c0_473 = arith.constant 0 : index
    %618 = vector.load %arg6[%c1_470, %c5_471, %c4_472, %c0_473] : memref<2x7x22x16xf32, #tpu.memory_space<vmem>>, vector<1x1x16x16xf32>
    %619 = vector.shape_cast %618 : vector<1x1x16x16xf32> to vector<16x16xf32>
    %620 = vector.broadcast %617 : f32 to vector<16x16xf32>
    %621 = arith.mulf %620, %619 : vector<16x16xf32>
    %622 = arith.addf %598, %621 : vector<16x16xf32>
    %c89 = arith.constant 89 : index
    %623 = memref.load %arg1[%c89] : memref<98xf32, #tpu.memory_space<smem>>
    %c1_474 = arith.constant 1 : index
    %c5_475 = arith.constant 5 : index
    %c5_476 = arith.constant 5 : index
    %c0_477 = arith.constant 0 : index
    %624 = vector.load %arg6[%c1_474, %c5_475, %c5_476, %c0_477] : memref<2x7x22x16xf32, #tpu.memory_space<vmem>>, vector<1x1x16x16xf32>
    %625 = vector.shape_cast %624 : vector<1x1x16x16xf32> to vector<16x16xf32>
    %626 = vector.broadcast %623 : f32 to vector<16x16xf32>
    %627 = arith.mulf %626, %625 : vector<16x16xf32>
    %628 = arith.addf %604, %627 : vector<16x16xf32>
    %c96 = arith.constant 96 : index
    %629 = memref.load %arg1[%c96] : memref<98xf32, #tpu.memory_space<smem>>
    %c1_478 = arith.constant 1 : index
    %c5_479 = arith.constant 5 : index
    %c6_480 = arith.constant 6 : index
    %c0_481 = arith.constant 0 : index
    %630 = vector.load %arg6[%c1_478, %c5_479, %c6_480, %c0_481] : memref<2x7x22x16xf32, #tpu.memory_space<vmem>>, vector<1x1x16x16xf32>
    %631 = vector.shape_cast %630 : vector<1x1x16x16xf32> to vector<16x16xf32>
    %632 = vector.broadcast %629 : f32 to vector<16x16xf32>
    %633 = arith.mulf %632, %631 : vector<16x16xf32>
    %634 = arith.addf %610, %633 : vector<16x16xf32>
    %c55 = arith.constant 55 : index
    %635 = memref.load %arg1[%c55] : memref<98xf32, #tpu.memory_space<smem>>
    %c1_482 = arith.constant 1 : index
    %c6_483 = arith.constant 6 : index
    %c0_484 = arith.constant 0 : index
    %c0_485 = arith.constant 0 : index
    %636 = vector.load %arg6[%c1_482, %c6_483, %c0_484, %c0_485] : memref<2x7x22x16xf32, #tpu.memory_space<vmem>>, vector<1x1x16x16xf32>
    %637 = vector.shape_cast %636 : vector<1x1x16x16xf32> to vector<16x16xf32>
    %638 = vector.broadcast %635 : f32 to vector<16x16xf32>
    %639 = arith.mulf %638, %637 : vector<16x16xf32>
    %640 = arith.addf %616, %639 : vector<16x16xf32>
    %c62 = arith.constant 62 : index
    %641 = memref.load %arg1[%c62] : memref<98xf32, #tpu.memory_space<smem>>
    %c1_486 = arith.constant 1 : index
    %c6_487 = arith.constant 6 : index
    %c1_488 = arith.constant 1 : index
    %c0_489 = arith.constant 0 : index
    %642 = vector.load %arg6[%c1_486, %c6_487, %c1_488, %c0_489] : memref<2x7x22x16xf32, #tpu.memory_space<vmem>>, vector<1x1x16x16xf32>
    %643 = vector.shape_cast %642 : vector<1x1x16x16xf32> to vector<16x16xf32>
    %644 = vector.broadcast %641 : f32 to vector<16x16xf32>
    %645 = arith.mulf %644, %643 : vector<16x16xf32>
    %646 = arith.addf %622, %645 : vector<16x16xf32>
    %c69 = arith.constant 69 : index
    %647 = memref.load %arg1[%c69] : memref<98xf32, #tpu.memory_space<smem>>
    %c1_490 = arith.constant 1 : index
    %c6_491 = arith.constant 6 : index
    %c2_492 = arith.constant 2 : index
    %c0_493 = arith.constant 0 : index
    %648 = vector.load %arg6[%c1_490, %c6_491, %c2_492, %c0_493] : memref<2x7x22x16xf32, #tpu.memory_space<vmem>>, vector<1x1x16x16xf32>
    %649 = vector.shape_cast %648 : vector<1x1x16x16xf32> to vector<16x16xf32>
    %650 = vector.broadcast %647 : f32 to vector<16x16xf32>
    %651 = arith.mulf %650, %649 : vector<16x16xf32>
    %652 = arith.addf %628, %651 : vector<16x16xf32>
    %c76 = arith.constant 76 : index
    %653 = memref.load %arg1[%c76] : memref<98xf32, #tpu.memory_space<smem>>
    %c1_494 = arith.constant 1 : index
    %c6_495 = arith.constant 6 : index
    %c3_496 = arith.constant 3 : index
    %c0_497 = arith.constant 0 : index
    %654 = vector.load %arg6[%c1_494, %c6_495, %c3_496, %c0_497] : memref<2x7x22x16xf32, #tpu.memory_space<vmem>>, vector<1x1x16x16xf32>
    %655 = vector.shape_cast %654 : vector<1x1x16x16xf32> to vector<16x16xf32>
    %656 = vector.broadcast %653 : f32 to vector<16x16xf32>
    %657 = arith.mulf %656, %655 : vector<16x16xf32>
    %658 = arith.addf %634, %657 : vector<16x16xf32>
    %c83 = arith.constant 83 : index
    %659 = memref.load %arg1[%c83] : memref<98xf32, #tpu.memory_space<smem>>
    %c1_498 = arith.constant 1 : index
    %c6_499 = arith.constant 6 : index
    %c4_500 = arith.constant 4 : index
    %c0_501 = arith.constant 0 : index
    %660 = vector.load %arg6[%c1_498, %c6_499, %c4_500, %c0_501] : memref<2x7x22x16xf32, #tpu.memory_space<vmem>>, vector<1x1x16x16xf32>
    %661 = vector.shape_cast %660 : vector<1x1x16x16xf32> to vector<16x16xf32>
    %662 = vector.broadcast %659 : f32 to vector<16x16xf32>
    %663 = arith.mulf %662, %661 : vector<16x16xf32>
    %664 = arith.addf %640, %663 : vector<16x16xf32>
    %c90 = arith.constant 90 : index
    %665 = memref.load %arg1[%c90] : memref<98xf32, #tpu.memory_space<smem>>
    %c1_502 = arith.constant 1 : index
    %c6_503 = arith.constant 6 : index
    %c5_504 = arith.constant 5 : index
    %c0_505 = arith.constant 0 : index
    %666 = vector.load %arg6[%c1_502, %c6_503, %c5_504, %c0_505] : memref<2x7x22x16xf32, #tpu.memory_space<vmem>>, vector<1x1x16x16xf32>
    %667 = vector.shape_cast %666 : vector<1x1x16x16xf32> to vector<16x16xf32>
    %668 = vector.broadcast %665 : f32 to vector<16x16xf32>
    %669 = arith.mulf %668, %667 : vector<16x16xf32>
    %670 = arith.addf %646, %669 : vector<16x16xf32>
    %c97 = arith.constant 97 : index
    %671 = memref.load %arg1[%c97] : memref<98xf32, #tpu.memory_space<smem>>
    %c1_506 = arith.constant 1 : index
    %c6_507 = arith.constant 6 : index
    %c6_508 = arith.constant 6 : index
    %c0_509 = arith.constant 0 : index
    %672 = vector.load %arg6[%c1_506, %c6_507, %c6_508, %c0_509] : memref<2x7x22x16xf32, #tpu.memory_space<vmem>>, vector<1x1x16x16xf32>
    %673 = vector.shape_cast %672 : vector<1x1x16x16xf32> to vector<16x16xf32>
    %674 = vector.broadcast %671 : f32 to vector<16x16xf32>
    %675 = arith.mulf %674, %673 : vector<16x16xf32>
    %676 = arith.addf %652, %675 : vector<16x16xf32>
    %677 = arith.addf %670, %676 : vector<16x16xf32>
    %678 = arith.addf %658, %664 : vector<16x16xf32>
    %679 = arith.addf %677, %678 : vector<16x16xf32>
    %680 = arith.negf %679 : vector<16x16xf32>
    %681 = math.exp %680 : vector<16x16xf32>
    %cst_510 = arith.constant 1.000000e+00 : f32
    %682 = vector.broadcast %cst_510 : f32 to vector<16x16xf32>
    %683 = arith.addf %682, %681 : vector<16x16xf32>
    %684 = arith.divf %682, %683 : vector<16x16xf32>
    %c0_511 = arith.constant 0 : index
    %c0_512 = arith.constant 0 : index
    %c0_513 = arith.constant 0 : index
    %c0_514 = arith.constant 0 : index
    %685 = vector.load %arg3[%c0_511, %c0_512, %c0_513, %c0_514] : memref<1x4x16x16xf32, #tpu.memory_space<vmem>>, vector<1x4x16x16xf32>
    %686 = vector.shape_cast %685 : vector<1x4x16x16xf32> to vector<4x16x16xf32>
    %687 = vector.shape_cast %684 : vector<16x16xf32> to vector<1x16x16xf32>
    %688 = vector.broadcast %687 : vector<1x16x16xf32> to vector<4x16x16xf32>
    %689 = arith.mulf %686, %688 : vector<4x16x16xf32>
    %c0_515 = arith.constant 0 : index
    %c0_516 = arith.constant 0 : index
    %c0_517 = arith.constant 0 : index
    %c0_518 = arith.constant 0 : index
    %690 = vector.load %arg4[%c0_515, %c0_516, %c0_517, %c0_518] : memref<1x4x16x16xf32, #tpu.memory_space<vmem>>, vector<1x4x16x16xf32>
    %691 = vector.shape_cast %690 : vector<1x4x16x16xf32> to vector<4x16x16xf32>
    %692 = vector.shape_cast %689 : vector<4x16x16xf32> to vector<1x4x16x16xf32>
    tpu.vector_store %arg4[%c0_515, %c0_516, %c0_517, %c0_518], %692 {strides = array<i32>} : memref<1x4x16x16xf32, #tpu.memory_space<vmem>>, vector<1x4x16x16xf32>,
    return
  }
  func.func @transform_0(%arg0: i32) -> i32 {
    %c0_i32 = arith.constant 0 : i32
    %c0_i32_0 = arith.constant 0 : i32
    return %c0_i32 : i32
  }
  func.func @transform_1(%arg0: i32) -> i32 {
    %c0_i32 = arith.constant 0 : i32
    %c0_i32_0 = arith.constant 0 : i32
    return %c0_i32 : i32
  }
  func.func @transform_2(%arg0: i32) -> (i32, i32, i32, i32) {
    %c0_i32 = arith.constant 0 : i32
    %c0_i32_0 = arith.constant 0 : i32
    %c0_i32_1 = arith.constant 0 : i32
    %c0_i32_2 = arith.constant 0 : i32
    return %arg0, %c0_i32, %c0_i32_0, %c0_i32_1 : i32, i32, i32, i32
  }
  func.func @transform_3(%arg0: i32) -> (i32, i32, i32, i32) {
    %c0_i32 = arith.constant 0 : i32
    %c0_i32_0 = arith.constant 0 : i32
    %c0_i32_1 = arith.constant 0 : i32
    %c0_i32_2 = arith.constant 0 : i32
    return %arg0, %c0_i32, %c0_i32_0, %c0_i32_1 : i32, i32, i32, i32
  }
}

</mosaic_0001>

<llo_original>
// kernel: tpu_custom_call.1
$region0: #{tpu_custom_call.1}
  #allocation0 [shape = 'u32[]', space=smem, size = 0x4, offset = 0x4, fixed_abs, tag = 'smem constant byte address 0x4 - core index']
  #allocation1 [shape = 'u32[144,128]{1,0:T(1,128)}', space=vmem, size = 0x12000, scoped, tag = 'internal scratch']
  #allocation2 [shape = 'f32[2,22,22]{2,1,0:T(8,128)}', space=vmem, size = 0x6000, scoped, tag = 'scratch operand']
  #allocation3 [shape = 'f32[2,7,22,16]{3,2,1,0:T(8,128)}', space=vmem, size = 0x2a000, scoped, tag = 'scratch operand']
  #allocation4 [shape = 'f32[1]{0:T(128)S(6)}', space=smem, size = 0x200, scoped, tag = 'scoped memory for tpu_custom_call.1']
  %s0 = inlined_call_operand.vmem [shape: f32[98], index: 0, kind: input, shape index: {}]
  %s1 = inlined_call_operand.<no memory space> [shape: f32[1], index: 1, kind: input, shape index: {}]
  %s2 = inlined_call_operand.hbm [shape: f32[2,4,16,16], index: 2, kind: input, shape index: {}]
  %s3 = inlined_call_operand.hbm [shape: f32[2,4,16,16], index: 3, kind: output, shape index: {}]
  %s4 = sld [smem:[#allocation0]]
  $region53: #{tpu_custom_call.1} parent=0
    _
  %s6 = ssub.s32 1, %s4
  %s7 = scalar_select 0, %s6, %s4
  %8 = sst [smem:[#allocation4]] %s1
  $region1: #{tpu_custom_call.1} parent=0
    #allocation5 [shape = 'u8[512]{0}', space=smem, size = 0x200, scoped, tag = 'input window, operand 0, single buffered']
    #allocation6 [shape = 's32[2]{0}', space=sflag, size = 0x8, scoped, tag = 'scoped memory for tpu_custom_call.1']
    #allocation7 [shape = 's32[2]{0}', space=sflag, size = 0x8, scoped, tag = 'scoped memory for tpu_custom_call.1']
    #allocation8 [shape = 's32[2]{0}', space=sflag, size = 0x8, scoped, tag = 'scoped memory for tpu_custom_call.1']
    #allocation9 [shape = 'u8[65536]{0}', space=vmem, size = 0x10000, scoped, tag = 'input window, operand 2']
    #allocation10 [shape = 'u8[65536]{0}', space=vmem, size = 0x10000, scoped, tag = 'output window, operand 0']
    %9 = vsyncpa [#allocation8], 0
    %10 = vsyncpa [#allocation6], 0
    %s11 = scalar_lea.sflag [#allocation6], 1
    %12 = vsyncpa %s11, 0
    %13 = vsyncpa [#allocation7], 0
    %s14 = scalar_lea.sflag [#allocation7], 1
    %15 = vsyncpa %s14, 0
    loop: start=0, step=1, limit=4
    $region2: #{tpu_custom_call.1} parent=1 // loop_pre_header
      _
    $region3: #{tpu_custom_call.1} parent=1 // loop_header
      %s17 = sphi 0, %s21
      %p18 = scmp.ge.s32.totalorder %s17, 4
      %s25 = sphi 0, %s25
      %s27 = sphi 0, %s25
      %s28 = sphi 0, %s27
      %s42 = sphi 0, %s28
      %s46 = sphi 0, %s46
      %s48 = sphi 0, %s46
      %s49 = sphi 0, %s48
      %s63 = sphi 0, %s49
      %s69 = sphi 0, %s71
      %s72 = sphi 0, %s69
      %s73 = sphi 0, %s72
      %s89 = sphi 0, %s73
      %s95 = sphi 0, %s97
      %s98 = sphi 0, %s95
      %s99 = sphi 0, %s98
      %s115 = sphi 0, %s99
    $region4: #{tpu_custom_call.1} parent=1 // loop_header_branch
      %20 = sbr.rel (%p18) target = $region8
    $region5: #{tpu_custom_call.1} parent=1 // loop_body
      %s22 = ssub.s32 %s17, 1
      %s23 = ssub.s32 %s17, 2
      %s24 = sadd.s32 %s17, 1
      %s26 = sadd.s32 %s25, 1
      %p29 = scmp.eq.s32.totalorder %s17, 1
      %p30 = scmp.ne.s32.totalorder %s25, %s27
      %p31 = scmp.eq.s32.totalorder %s17, 0
      %p32 = por %p30, %p31
      %p33 = scmp.ne.s32.totalorder %s25, %s27
      %p34 = scmp.eq.s32.totalorder %s22, 1
      %p35 = por %p33, %p34
      %p36 = scmp.ne.s32.totalorder %s27, %s28
      %p37 = scmp.eq.s32.totalorder %s22, 0
      %p38 = por %p36, %p37
      %p39 = scmp.ne.s32.totalorder %s27, %s28
      %p40 = scmp.eq.s32.totalorder %s23, 1
      %p41 = por %p39, %p40
      %p43 = scmp.ne.s32.totalorder %s28, %s42
      %p44 = scmp.eq.s32.totalorder %s23, 0
      %p45 = por %p43, %p44
      %s47 = sadd.s32 %s46, 1
      %p50 = scmp.eq.s32.totalorder %s17, 1
      %p51 = scmp.ne.s32.totalorder %s46, %s48
      %p52 = scmp.eq.s32.totalorder %s17, 0
      %p53 = por %p51, %p52
      %p54 = scmp.ne.s32.totalorder %s46, %s48
      %p55 = scmp.eq.s32.totalorder %s22, 1
      %p56 = por %p54, %p55
      %p57 = scmp.ne.s32.totalorder %s48, %s49
      %p58 = scmp.eq.s32.totalorder %s22, 0
      %p59 = por %p57, %p58
      %p60 = scmp.ne.s32.totalorder %s48, %s49
      %p61 = scmp.eq.s32.totalorder %s23, 1
      %p62 = por %p60, %p61
      %p64 = scmp.ne.s32.totalorder %s49, %s63
      %p65 = scmp.eq.s32.totalorder %s23, 0
      %p66 = por %p64, %p65
      %s67 = ssub.s32 %s17, %s24
      %p68 = scmp.eq.s32.totalorder %s67, 0
      %s70 = sadd.s32 %s69, 1
      %s71 = scalar_select %p68, %s69, %s70
      %p74 = pneg %p68
      %p75 = scmp.eq.s32.totalorder %s17, 1
      %p76 = por %p74, %p75
      %p77 = scmp.ne.s32.totalorder %s69, %s72
      %p78 = scmp.eq.s32.totalorder %s17, 0
      %p79 = por %p77, %p78
      %p80 = scmp.ne.s32.totalorder %s69, %s72
      %p81 = scmp.eq.s32.totalorder %s22, 1
      %p82 = por %p80, %p81
      %p83 = scmp.ne.s32.totalorder %s72, %s73
      %p84 = scmp.eq.s32.totalorder %s22, 0
      %p85 = por %p83, %p84
      %p86 = scmp.ne.s32.totalorder %s72, %s73
      %p87 = scmp.eq.s32.totalorder %s23, 1
      %p88 = por %p86, %p87
      %p90 = scmp.ne.s32.totalorder %s73, %s89
      %p91 = scmp.eq.s32.totalorder %s23, 0
      %p92 = por %p90, %p91
      %s93 = ssub.s32 %s17, %s24
      %p94 = scmp.eq.s32.totalorder %s93, 0
      %s96 = sadd.s32 %s95, 1
      %s97 = scalar_select %p94, %s95, %s96
      %p100 = pneg %p94
      %p101 = scmp.eq.s32.totalorder %s17, 1
      %p102 = por %p100, %p101
      %p103 = scmp.ne.s32.totalorder %s95, %s98
      %p104 = scmp.eq.s32.totalorder %s17, 0
      %p105 = por %p103, %p104
      %p106 = scmp.ne.s32.totalorder %s95, %s98
      %p107 = scmp.eq.s32.totalorder %s22, 1
      %p108 = por %p106, %p107
      %p109 = scmp.ne.s32.totalorder %s98, %s99
      %p110 = scmp.eq.s32.totalorder %s22, 0
      %p111 = por %p109, %p110
      %p112 = scmp.ne.s32.totalorder %s98, %s99
      %p113 = scmp.eq.s32.totalorder %s23, 1
      %p114 = por %p112, %p113
      %p116 = scmp.ne.s32.totalorder %s99, %s115
      %p117 = scmp.eq.s32.totalorder %s23, 0
      %p118 = por %p116, %p117
      %p119 = scmp.le.s32.totalorder 1, %s17
      %p120 = scmp.lt.s32.totalorder %s17, 3
      %p121 = pnand %p119, %p120
      %p122 = pneg %p121
      // Predicated region
      $region9: #{tpu_custom_call.1} parent=5 // pred_check
        _
      $region10: #{tpu_custom_call.1} parent=5 // pred_check_branch
        %124 = sbr.rel (%p121) target = $region12
      $region11: #{tpu_custom_call.1} parent=5 // pred_region
        %s125 = ssub.s32 %s17, 1
        // Predicated region
        $region13: #{tpu_custom_call.1} parent=11 // pred_check
          %p126 = pneg %p38
        $region14: #{tpu_custom_call.1} parent=11 // pred_check_branch
          %128 = sbr.rel (%p126) target = $region16
        $region15: #{tpu_custom_call.1} parent=11 // pred_region
          %s130 = ssub.s32 16, 16
          %131 = vsyncadd [#allocation8], %s130
          %s133 = sshll.u32 %s0, 4
          %s134 = int_to_ptr.vmem [resolvable:$true] %s133
          %136 = dma.vmem_to_smem %s134, 16, [#allocation5], [#allocation8]
        $region16: #{tpu_custom_call.1} parent=11 // pred_fallthru
          _
        // Predicated region
        $region17: #{tpu_custom_call.1} parent=11 // pred_check
          %p137 = pneg %p59
        $region18: #{tpu_custom_call.1} parent=11 // pred_check_branch
          %139 = sbr.rel (%p137) target = $region20
        $region19: #{tpu_custom_call.1} parent=11 // pred_region
          _
        $region20: #{tpu_custom_call.1} parent=11 // pred_fallthru
          _
      $region12: #{tpu_custom_call.1} parent=5 // pred_fallthru
        _
      %p140 = scmp.lt.s32.totalorder %s17, 2
      // Predicated region
      $region21: #{tpu_custom_call.1} parent=5 // pred_check
        %p141 = pneg %p140
      $region22: #{tpu_custom_call.1} parent=5 // pred_check_branch
        %143 = sbr.rel (%p141) target = $region24
      $region23: #{tpu_custom_call.1} parent=5 // pred_region
        // Predicated region
        $region25: #{tpu_custom_call.1} parent=23 // pred_check
          %p144 = pneg %p79
        $region26: #{tpu_custom_call.1} parent=23 // pred_check_branch
          %146 = sbr.rel (%p144) target = $region28
        $region27: #{tpu_custom_call.1} parent=23 // pred_region
          %s147 = sand.u32 %s69, 1
          %s148 = scalar_lea.sflag [#allocation6], %s147
          %s149 = sand.u32 %s69, 1
          %s150 = smul.addr %s149, 64
          %s151 = scalar_lea.vmem [#allocation9], %s150
          %s153 = ssub.s32 1024, 1024
          %154 = vsyncadd %s148, %s153
          %s155 = smul.addr %s17, 8
          %s156 = smul.addr %s155, 128
          %s157 = scalar_lea.hbm %s2, %s156
          %s158 = sshll.u32 %s151, 4
          %s159 = int_to_ptr.vmem [resolvable:$true] %s158
          %164 = dma.hbm_to_vmem [thread:$0]  %s157, 1024, %s159, %s148, 128, 128, 8
        $region28: #{tpu_custom_call.1} parent=23 // pred_fallthru
          _
      $region24: #{tpu_custom_call.1} parent=5 // pred_fallthru
        _
      %p165 = scmp.le.s32.totalorder 1, %s17
      %p166 = scmp.lt.s32.totalorder %s17, 3
      %p167 = pnand %p165, %p166
      %p168 = pneg %p167
      // Predicated region
      $region29: #{tpu_custom_call.1} parent=5 // pred_check
        _
      $region30: #{tpu_custom_call.1} parent=5 // pred_check_branch
        %170 = sbr.rel (%p167) target = $region32
      $region31: #{tpu_custom_call.1} parent=5 // pred_region
        %s171 = ssub.s32 %s17, 1
        // Predicated region
        $region33: #{tpu_custom_call.1} parent=31 // pred_check
          %p172 = pneg %p38
        $region34: #{tpu_custom_call.1} parent=31 // pred_check_branch
          %174 = sbr.rel (%p172) target = $region36
        $region35: #{tpu_custom_call.1} parent=31 // pred_region
          %175 = dma.done [#allocation8], 16
        $region36: #{tpu_custom_call.1} parent=31 // pred_fallthru
          _
        %s176 = sand.u32 %s72, 1
        %s177 = scalar_lea.sflag [#allocation6], %s176
        %s178 = sand.u32 %s72, 1
        %s179 = smul.addr %s178, 64
        %s180 = scalar_lea.vmem [#allocation9], %s179
        // Predicated region
        $region37: #{tpu_custom_call.1} parent=31 // pred_check
          %p181 = pneg %p85
        $region38: #{tpu_custom_call.1} parent=31 // pred_check_branch
          %183 = sbr.rel (%p181) target = $region40
        $region39: #{tpu_custom_call.1} parent=31 // pred_region
          %184 = dma.done %s177, 1024
        $region40: #{tpu_custom_call.1} parent=31 // pred_fallthru
          _
        %185 = sfence
        %p186 = pneg %p38
        %p187 = pneg %p35
        %p188 = pneg %p59
        %p189 = pneg %p56
        %s190 = sand.u32 %s72, 1
        %s191 = scalar_lea.sflag [#allocation6], %s190
        %s192 = sand.u32 %s72, 1
        %s193 = smul.addr %s192, 64
        %s194 = scalar_lea.vmem [#allocation9], %s193
        %p195 = pneg %p85
        %p196 = pneg %p82
        %p197 = pneg %p111
        %p198 = pneg %p108
        %s199 = sand.u32 %s98, 1
        %s200 = scalar_lea.sflag [#allocation7], %s199
        %s201 = sand.u32 %s98, 1
        %s202 = smul.addr %s201, 64
        %s203 = scalar_lea.vmem [#allocation10], %s202
        %vm204 = vcmask 179200
        %205 = vst.msk [vmem:[#allocation2] sm:$0xff] %vm204, 0.0
        %206 = vst.msk [vmem:[#allocation2 + $0x8] sm:$0xff] %vm204, 0.0
        %vm207 = vcmask 177152
        %208 = vst.msk [vmem:[#allocation2 + $0x10] sm:$0x3f] %vm207, 0.0
        %209 = vst.msk [vmem:[#allocation2 + $0x18] sm:$0xff] %vm204, 0.0
        %210 = vst.msk [vmem:[#allocation2 + $0x20] sm:$0xff] %vm204, 0.0
        %211 = vst.msk [vmem:[#allocation2 + $0x28] sm:$0x3f] %vm207, 0.0
        %v212 = vld [vmem:[%s180] sm:$0xff]
        %v213 = vld [vmem:[%s180 + $0x8] sm:$0xff]
        %v214 = vld [vmem:[%s180 + $0x10] sm:$0xff]
        %v215 = vld [vmem:[%s180 + $0x18] sm:$0xff]
        %v216 = vld [vmem:[%s180 + $0x20] sm:$0xff]
        %v217 = vld [vmem:[%s180 + $0x28] sm:$0xff]
        %v218 = vld [vmem:[%s180 + $0x30] sm:$0xff]
        %v219 = vld [vmem:[%s180 + $0x38] sm:$0xff]
        %vm220 = vcmask 130048
        %v221 = vsel %vm220, %v212, 0.0
        %v222 = vsel %vm220, %v214, 0.0
        %v223 = vadd.f32 %v221, %v222
        %v224 = vsel %vm220, %v216, 0.0
        %v225 = vadd.f32 %v223, %v224
        %v226 = vsel %vm220, %v218, 0.0
        %v227 = vadd.f32 %v225, %v226
        %v228 = vsel %vm220, %v213, 0.0
        %v229 = vsel %vm220, %v215, 0.0
        %v230 = vadd.f32 %v228, %v229
        %v231 = vsel %vm220, %v217, 0.0
        %v232 = vadd.f32 %v230, %v231
        %v233 = vsel %vm220, %v219, 0.0
        %v234 = vadd.f32 %v232, %v233
        %v235 = vmul.f32 %v227, 0.25
        %v236 = vmul.f32 %v234, 0.25
        %v237 = vsel %vm220, %v212, -inf
        %v238 = vsel %vm220, %v214, -inf
        %v239 = vsel %vm220, %v216, -inf
        %v240 = vmax.f32 %v237, %v239
        %v241 = vsel %vm220, %v218, -inf
        %v242 = vmax.f32 %v238, %v241
        %v243 = vmax.f32 %v240, %v242
        %v244 = vsel %vm220, %v213, -inf
        %v245 = vsel %vm220, %v215, -inf
        %v246 = vsel %vm220, %v217, -inf
        %v247 = vmax.f32 %v244, %v246
        %v248 = vsel %vm220, %v219, -inf
        %v249 = vmax.f32 %v245, %v248
        %v250 = vmax.f32 %v247, %v249
        %253 = vrot.lane.b32.xlu0 %v235, 3
        %v254 = vpop.permute.xlu0 %253
        %255 = vrot.lane.b32.xlu0 %v236, 3
        %v256 = vpop.permute.xlu0 %255
        %vm259 = vcmask 154648
        %260 = vst.msk [vmem:[#allocation2 + $0x3] sm:$0xff] %vm259, %v254
        %261 = vst.msk [vmem:[#allocation2 + $0xb] sm:$0xff] %vm259, %v256
        %264 = vrot.lane.b32.xlu0 %v243, 3
        %v265 = vpop.permute.xlu0 %264
        %266 = vrot.lane.b32.xlu0 %v250, 3
        %v267 = vpop.permute.xlu0 %266
        %s270 = scalar_lea.vmem [#allocation2], 24
        %271 = vst.msk [vmem:[%s270 + $0x3] sm:$0xff] %vm259, %v265
        %272 = vst.msk [vmem:[%s270 + $0xb] sm:$0xff] %vm259, %v267
        %v273 = vld [vmem:[#allocation2] sm:$0xff]
        %v274 = vld [vmem:[#allocation2 + $0x8] sm:$0xff]
        %v275 = vld [vmem:[#allocation2 + $0x10] sm:$0x3f]
        %276 = vst.msk [vmem:[#allocation3] sm:$0xff] %vm220, %v273
        %277 = vst.msk [vmem:[#allocation3 + $0x8] sm:$0xff] %vm220, %v274
        %vm278 = vcmask 128000
        %279 = vst.msk [vmem:[#allocation3 + $0x10] sm:$0x3f] %vm278, %v275
        %v280 = vld [vmem:[#allocation2] sm:$0xff]
        %v281 = vld [vmem:[#allocation2 + $0x8] sm:$0xff]
        %v282 = vld [vmem:[#allocation2 + $0x10] sm:$0x3f]
        %286 = vrot.lane.b32.xlu0 %v280, 127
        %v287 = vpop.permute.xlu0 %286
        %288 = vrot.lane.b32.xlu0 %v281, 127
        %v289 = vpop.permute.xlu0 %288
        %290 = vrot.lane.b32.xlu0 %v282, 127
        %v291 = vpop.permute.xlu0 %290
        %s295 = scalar_lea.vmem [#allocation3], 24
        %296 = vst.msk [vmem:[%s295] sm:$0xff] %vm220, %v287
        %297 = vst.msk [vmem:[%s295 + $0x8] sm:$0xff] %vm220, %v289
        %298 = vst.msk [vmem:[%s295 + $0x10] sm:$0x3f] %vm278, %v291
        %v299 = vld [vmem:[#allocation2] sm:$0xff]
        %v300 = vld [vmem:[#allocation2 + $0x8] sm:$0xff]
        %v301 = vld [vmem:[#allocation2 + $0x10] sm:$0x3f]
        %305 = vrot.lane.b32.xlu0 %v299, 126
        %v306 = vpop.permute.xlu0 %305
        %307 = vrot.lane.b32.xlu0 %v300, 126
        %v308 = vpop.permute.xlu0 %307
        %309 = vrot.lane.b32.xlu0 %v301, 126
        %v310 = vpop.permute.xlu0 %309
        %s314 = scalar_lea.vmem [#allocation3], 48
        %315 = vst.msk [vmem:[%s314] sm:$0xff] %vm220, %v306
        %316 = vst.msk [vmem:[%s314 + $0x8] sm:$0xff] %vm220, %v308
        %317 = vst.msk [vmem:[%s314 + $0x10] sm:$0x3f] %vm278, %v310
        %v318 = vld [vmem:[#allocation2] sm:$0xff]
        %v319 = vld [vmem:[#allocation2 + $0x8] sm:$0xff]
        %v320 = vld [vmem:[#allocation2 + $0x10] sm:$0x3f]
        %324 = vrot.lane.b32.xlu0 %v318, 125
        %v325 = vpop.permute.xlu0 %324
        %326 = vrot.lane.b32.xlu0 %v319, 125
        %v327 = vpop.permute.xlu0 %326
        %328 = vrot.lane.b32.xlu0 %v320, 125
        %v329 = vpop.permute.xlu0 %328
        %s333 = scalar_lea.vmem [#allocation3], 72
        %334 = vst.msk [vmem:[%s333] sm:$0xff] %vm220, %v325
        %335 = vst.msk [vmem:[%s333 + $0x8] sm:$0xff] %vm220, %v327
        %336 = vst.msk [vmem:[%s333 + $0x10] sm:$0x3f] %vm278, %v329
        %v337 = vld [vmem:[#allocation2] sm:$0xff]
        %v338 = vld [vmem:[#allocation2 + $0x8] sm:$0xff]
        %v339 = vld [vmem:[#allocation2 + $0x10] sm:$0x3f]
        %343 = vrot.lane.b32.xlu0 %v337, 124
        %v344 = vpop.permute.xlu0 %343
        %345 = vrot.lane.b32.xlu0 %v338, 124
        %v346 = vpop.permute.xlu0 %345
        %347 = vrot.lane.b32.xlu0 %v339, 124
        %v348 = vpop.permute.xlu0 %347
        %s352 = scalar_lea.vmem [#allocation3], 96
        %353 = vst.msk [vmem:[%s352] sm:$0xff] %vm220, %v344
        %354 = vst.msk [vmem:[%s352 + $0x8] sm:$0xff] %vm220, %v346
        %355 = vst.msk [vmem:[%s352 + $0x10] sm:$0x3f] %vm278, %v348
        %v356 = vld [vmem:[#allocation2] sm:$0xff]
        %v357 = vld [vmem:[#allocation2 + $0x8] sm:$0xff]
        %v358 = vld [vmem:[#allocation2 + $0x10] sm:$0x3f]
        %362 = vrot.lane.b32.xlu0 %v356, 123
        %v363 = vpop.permute.xlu0 %362
        %364 = vrot.lane.b32.xlu0 %v357, 123
        %v365 = vpop.permute.xlu0 %364
        %366 = vrot.lane.b32.xlu0 %v358, 123
        %v367 = vpop.permute.xlu0 %366
        %s371 = scalar_lea.vmem [#allocation3], 120
        %372 = vst.msk [vmem:[%s371] sm:$0xff] %vm220, %v363
        %373 = vst.msk [vmem:[%s371 + $0x8] sm:$0xff] %vm220, %v365
        %374 = vst.msk [vmem:[%s371 + $0x10] sm:$0x3f] %vm278, %v367
        %v375 = vld [vmem:[#allocation2] sm:$0xff]
        %v376 = vld [vmem:[#allocation2 + $0x8] sm:$0xff]
        %v377 = vld [vmem:[#allocation2 + $0x10] sm:$0x3f]
        %381 = vrot.lane.b32.xlu0 %v375, 122
        %v382 = vpop.permute.xlu0 %381
        %383 = vrot.lane.b32.xlu0 %v376, 122
        %v384 = vpop.permute.xlu0 %383
        %385 = vrot.lane.b32.xlu0 %v377, 122
        %v386 = vpop.permute.xlu0 %385
        %s390 = scalar_lea.vmem [#allocation3], 144
        %391 = vst.msk [vmem:[%s390] sm:$0xff] %vm220, %v382
        %392 = vst.msk [vmem:[%s390 + $0x8] sm:$0xff] %vm220, %v384
        %393 = vst.msk [vmem:[%s390 + $0x10] sm:$0x3f] %vm278, %v386
        %v394 = vld [vmem:[%s270] sm:$0xff]
        %v395 = vld [vmem:[%s270 + $0x8] sm:$0xff]
        %v396 = vld [vmem:[%s270 + $0x10] sm:$0x3f]
        %s397 = scalar_lea.vmem [#allocation3], 168
        %398 = vst.msk [vmem:[%s397] sm:$0xff] %vm220, %v394
        %399 = vst.msk [vmem:[%s397 + $0x8] sm:$0xff] %vm220, %v395
        %400 = vst.msk [vmem:[%s397 + $0x10] sm:$0x3f] %vm278, %v396
        %v401 = vld [vmem:[%s270] sm:$0xff]
        %v402 = vld [vmem:[%s270 + $0x8] sm:$0xff]
        %v403 = vld [vmem:[%s270 + $0x10] sm:$0x3f]
        %407 = vrot.lane.b32.xlu0 %v401, 127
        %v408 = vpop.permute.xlu0 %407
        %409 = vrot.lane.b32.xlu0 %v402, 127
        %v410 = vpop.permute.xlu0 %409
        %411 = vrot.lane.b32.xlu0 %v403, 127
        %v412 = vpop.permute.xlu0 %411
        %s416 = scalar_lea.vmem [#allocation3], 192
        %417 = vst.msk [vmem:[%s416] sm:$0xff] %vm220, %v408
        %418 = vst.msk [vmem:[%s416 + $0x8] sm:$0xff] %vm220, %v410
        %419 = vst.msk [vmem:[%s416 + $0x10] sm:$0x3f] %vm278, %v412
        %v420 = vld [vmem:[%s270] sm:$0xff]
        %v421 = vld [vmem:[%s270 + $0x8] sm:$0xff]
        %v422 = vld [vmem:[%s270 + $0x10] sm:$0x3f]
        %426 = vrot.lane.b32.xlu0 %v420, 126
        %v427 = vpop.permute.xlu0 %426
        %428 = vrot.lane.b32.xlu0 %v421, 126
        %v429 = vpop.permute.xlu0 %428
        %430 = vrot.lane.b32.xlu0 %v422, 126
        %v431 = vpop.permute.xlu0 %430
        %s435 = scalar_lea.vmem [#allocation3], 216
        %436 = vst.msk [vmem:[%s435] sm:$0xff] %vm220, %v427
        %437 = vst.msk [vmem:[%s435 + $0x8] sm:$0xff] %vm220, %v429
        %438 = vst.msk [vmem:[%s435 + $0x10] sm:$0x3f] %vm278, %v431
        %v439 = vld [vmem:[%s270] sm:$0xff]
        %v440 = vld [vmem:[%s270 + $0x8] sm:$0xff]
        %v441 = vld [vmem:[%s270 + $0x10] sm:$0x3f]
        %445 = vrot.lane.b32.xlu0 %v439, 125
        %v446 = vpop.permute.xlu0 %445
        %447 = vrot.lane.b32.xlu0 %v440, 125
        %v448 = vpop.permute.xlu0 %447
        %449 = vrot.lane.b32.xlu0 %v441, 125
        %v450 = vpop.permute.xlu0 %449
        %s454 = scalar_lea.vmem [#allocation3], 240
        %455 = vst.msk [vmem:[%s454] sm:$0xff] %vm220, %v446
        %456 = vst.msk [vmem:[%s454 + $0x8] sm:$0xff] %vm220, %v448
        %457 = vst.msk [vmem:[%s454 + $0x10] sm:$0x3f] %vm278, %v450
        %v458 = vld [vmem:[%s270] sm:$0xff]
        %v459 = vld [vmem:[%s270 + $0x8] sm:$0xff]
        %v460 = vld [vmem:[%s270 + $0x10] sm:$0x3f]
        %464 = vrot.lane.b32.xlu0 %v458, 124
        %v465 = vpop.permute.xlu0 %464
        %466 = vrot.lane.b32.xlu0 %v459, 124
        %v467 = vpop.permute.xlu0 %466
        %468 = vrot.lane.b32.xlu0 %v460, 124
        %v469 = vpop.permute.xlu0 %468
        %s473 = scalar_lea.vmem [#allocation3], 264
        %474 = vst.msk [vmem:[%s473] sm:$0xff] %vm220, %v465
        %475 = vst.msk [vmem:[%s473 + $0x8] sm:$0xff] %vm220, %v467
        %476 = vst.msk [vmem:[%s473 + $0x10] sm:$0x3f] %vm278, %v469
        %v477 = vld [vmem:[%s270] sm:$0xff]
        %v478 = vld [vmem:[%s270 + $0x8] sm:$0xff]
        %v479 = vld [vmem:[%s270 + $0x10] sm:$0x3f]
        %483 = vrot.lane.b32.xlu0 %v477, 123
        %v484 = vpop.permute.xlu0 %483
        %485 = vrot.lane.b32.xlu0 %v478, 123
        %v486 = vpop.permute.xlu0 %485
        %487 = vrot.lane.b32.xlu0 %v479, 123
        %v488 = vpop.permute.xlu0 %487
        %s492 = scalar_lea.vmem [#allocation3], 288
        %493 = vst.msk [vmem:[%s492] sm:$0xff] %vm220, %v484
        %494 = vst.msk [vmem:[%s492 + $0x8] sm:$0xff] %vm220, %v486
        %495 = vst.msk [vmem:[%s492 + $0x10] sm:$0x3f] %vm278, %v488
        %v496 = vld [vmem:[%s270] sm:$0xff]
        %v497 = vld [vmem:[%s270 + $0x8] sm:$0xff]
        %v498 = vld [vmem:[%s270 + $0x10] sm:$0x3f]
        %502 = vrot.lane.b32.xlu0 %v496, 122
        %v503 = vpop.permute.xlu0 %502
        %504 = vrot.lane.b32.xlu0 %v497, 122
        %v505 = vpop.permute.xlu0 %504
        %506 = vrot.lane.b32.xlu0 %v498, 122
        %v507 = vpop.permute.xlu0 %506
        %s511 = scalar_lea.vmem [#allocation3], 312
        %512 = vst.msk [vmem:[%s511] sm:$0xff] %vm220, %v503
        %513 = vst.msk [vmem:[%s511 + $0x8] sm:$0xff] %vm220, %v505
        %514 = vst.msk [vmem:[%s511 + $0x10] sm:$0x3f] %vm278, %v507
        %s515 = sld [smem:[#allocation4]]
        %v516 = vstv %s515
        %s517 = sld [smem:[#allocation5]]
        %v518 = vld [vmem:[#allocation3] sm:$0xff]
        %v519 = vld [vmem:[#allocation3 + $0x8] sm:$0xff]
        %v520 = vstv %s517
        %v521 = vmul.f32 %v520, %v518
        %v522 = vmul.f32 %v520, %v519
        %v523 = vadd.f32 %v516, %v521
        %v524 = vadd.f32 %v516, %v522
        %s525 = sld [smem:[#allocation5 + $0x7]]
        %v526 = vld [vmem:[#allocation3 + $0x1] sm:$0xff]
        %v527 = vld [vmem:[#allocation3 + $0x9] sm:$0xff]
        %v528 = vstv %s525
        %v529 = vmul.f32 %v528, %v526
        %v530 = vmul.f32 %v528, %v527
        %v531 = vadd.f32 %v529, 0.0
        %v532 = vadd.f32 %v530, 0.0
        %s533 = sld [smem:[#allocation5 + $0xe]]
        %v534 = vld [vmem:[#allocation3 + $0x2] sm:$0xff]
        %v535 = vld [vmem:[#allocation3 + $0xa] sm:$0xff]
        %v536 = vstv %s533
        %v537 = vmul.f32 %v536, %v534
        %v538 = vmul.f32 %v536, %v535
        %v539 = vadd.f32 %v537, 0.0
        %v540 = vadd.f32 %v538, 0.0
        %s541 = sld [smem:[#allocation5 + $0x15]]
        %v542 = vld [vmem:[#allocation3 + $0x3] sm:$0xff]
        %v543 = vld [vmem:[#allocation3 + $0xb] sm:$0xff]
        %v544 = vstv %s541
        %v545 = vmul.f32 %v544, %v542
        %v546 = vmul.f32 %v544, %v543
        %v547 = vadd.f32 %v545, 0.0
        %v548 = vadd.f32 %v546, 0.0
        %s549 = sld [smem:[#allocation5 + $0x1c]]
        %v550 = vld [vmem:[#allocation3 + $0x4] sm:$0xff]
        %v551 = vld [vmem:[#allocation3 + $0xc] sm:$0xff]
        %v552 = vstv %s549
        %v553 = vmul.f32 %v552, %v550
        %v554 = vmul.f32 %v552, %v551
        %v555 = vadd.f32 %v523, %v553
        %v556 = vadd.f32 %v524, %v554
        %s557 = sld [smem:[#allocation5 + $0x23]]
        %v558 = vld [vmem:[#allocation3 + $0x5] sm:$0xff]
        %v559 = vld [vmem:[#allocation3 + $0xd] sm:$0xff]
        %v560 = vstv %s557
        %v561 = vmul.f32 %v560, %v558
        %v562 = vmul.f32 %v560, %v559
        %v563 = vadd.f32 %v531, %v561
        %v564 = vadd.f32 %v532, %v562
        %s565 = sld [smem:[#allocation5 + $0x2a]]
        %v566 = vld [vmem:[#allocation3 + $0x6] sm:$0xff]
        %v567 = vld [vmem:[#allocation3 + $0xe] sm:$0xff]
        %v568 = vstv %s565
        %v569 = vmul.f32 %v568, %v566
        %v570 = vmul.f32 %v568, %v567
        %v571 = vadd.f32 %v539, %v569
        %v572 = vadd.f32 %v540, %v570
        %s573 = sld [smem:[#allocation5 + $0x1]]
        %v574 = vld [vmem:[%s295] sm:$0xff]
        %v575 = vld [vmem:[%s295 + $0x8] sm:$0xff]
        %v576 = vstv %s573
        %v577 = vmul.f32 %v576, %v574
        %v578 = vmul.f32 %v576, %v575
        %v579 = vadd.f32 %v547, %v577
        %v580 = vadd.f32 %v548, %v578
        %s581 = sld [smem:[#allocation5 + $0x8]]
        %v582 = vld [vmem:[%s295 + $0x1] sm:$0xff]
        %v583 = vld [vmem:[%s295 + $0x9] sm:$0xff]
        %v584 = vstv %s581
        %v585 = vmul.f32 %v584, %v582
        %v586 = vmul.f32 %v584, %v583
        %v587 = vadd.f32 %v555, %v585
        %v588 = vadd.f32 %v556, %v586
        %s589 = sld [smem:[#allocation5 + $0xf]]
        %v590 = vld [vmem:[%s295 + $0x2] sm:$0xff]
        %v591 = vld [vmem:[%s295 + $0xa] sm:$0xff]
        %v592 = vstv %s589
        %v593 = vmul.f32 %v592, %v590
        %v594 = vmul.f32 %v592, %v591
        %v595 = vadd.f32 %v563, %v593
        %v596 = vadd.f32 %v564, %v594
        %s597 = sld [smem:[#allocation5 + $0x16]]
        %v598 = vld [vmem:[%s295 + $0x3] sm:$0xff]
        %v599 = vld [vmem:[%s295 + $0xb] sm:$0xff]
        %v600 = vstv %s597
        %v601 = vmul.f32 %v600, %v598
        %v602 = vmul.f32 %v600, %v599
        %v603 = vadd.f32 %v571, %v601
        %v604 = vadd.f32 %v572, %v602
        %s605 = sld [smem:[#allocation5 + $0x1d]]
        %v606 = vld [vmem:[%s295 + $0x4] sm:$0xff]
        %v607 = vld [vmem:[%s295 + $0xc] sm:$0xff]
        %v608 = vstv %s605
        %v609 = vmul.f32 %v608, %v606
        %v610 = vmul.f32 %v608, %v607
        %v611 = vadd.f32 %v579, %v609
        %v612 = vadd.f32 %v580, %v610
        %s613 = sld [smem:[#allocation5 + $0x24]]
        %v614 = vld [vmem:[%s295 + $0x5] sm:$0xff]
        %v615 = vld [vmem:[%s295 + $0xd] sm:$0xff]
        %v616 = vstv %s613
        %v617 = vmul.f32 %v616, %v614
        %v618 = vmul.f32 %v616, %v615
        %v619 = vadd.f32 %v587, %v617
        %v620 = vadd.f32 %v588, %v618
        %s621 = sld [smem:[#allocation5 + $0x2b]]
        %v622 = vld [vmem:[%s295 + $0x6] sm:$0xff]
        %v623 = vld [vmem:[%s295 + $0xe] sm:$0xff]
        %v624 = vstv %s621
        %v625 = vmul.f32 %v624, %v622
        %v626 = vmul.f32 %v624, %v623
        %v627 = vadd.f32 %v595, %v625
        %v628 = vadd.f32 %v596, %v626
        %s629 = sld [smem:[#allocation5 + $0x2]]
        %v630 = vld [vmem:[%s314] sm:$0xff]
        %v631 = vld [vmem:[%s314 + $0x8] sm:$0xff]
        %v632 = vstv %s629
        %v633 = vmul.f32 %v632, %v630
        %v634 = vmul.f32 %v632, %v631
        %v635 = vadd.f32 %v603, %v633
        %v636 = vadd.f32 %v604, %v634
        %s637 = sld [smem:[#allocation5 + $0x9]]
        %v638 = vld [vmem:[%s314 + $0x1] sm:$0xff]
        %v639 = vld [vmem:[%s314 + $0x9] sm:$0xff]
        %v640 = vstv %s637
        %v641 = vmul.f32 %v640, %v638
        %v642 = vmul.f32 %v640, %v639
        %v643 = vadd.f32 %v611, %v641
        %v644 = vadd.f32 %v612, %v642
        %s645 = sld [smem:[#allocation5 + $0x10]]
        %v646 = vld [vmem:[%s314 + $0x2] sm:$0xff]
        %v647 = vld [vmem:[%s314 + $0xa] sm:$0xff]
        %v648 = vstv %s645
        %v649 = vmul.f32 %v648, %v646
        %v650 = vmul.f32 %v648, %v647
        %v651 = vadd.f32 %v619, %v649
        %v652 = vadd.f32 %v620, %v650
        %s653 = sld [smem:[#allocation5 + $0x17]]
        %v654 = vld [vmem:[%s314 + $0x3] sm:$0xff]
        %v655 = vld [vmem:[%s314 + $0xb] sm:$0xff]
        %v656 = vstv %s653
        %v657 = vmul.f32 %v656, %v654
        %v658 = vmul.f32 %v656, %v655
        %v659 = vadd.f32 %v627, %v657
        %v660 = vadd.f32 %v628, %v658
        %s661 = sld [smem:[#allocation5 + $0x1e]]
        %v662 = vld [vmem:[%s314 + $0x4] sm:$0xff]
        %v663 = vld [vmem:[%s314 + $0xc] sm:$0xff]
        %v664 = vstv %s661
        %v665 = vmul.f32 %v664, %v662
        %v666 = vmul.f32 %v664, %v663
        %v667 = vadd.f32 %v635, %v665
        %v668 = vadd.f32 %v636, %v666
        %s669 = sld [smem:[#allocation5 + $0x25]]
        %v670 = vld [vmem:[%s314 + $0x5] sm:$0xff]
        %v671 = vld [vmem:[%s314 + $0xd] sm:$0xff]
        %v672 = vstv %s669
        %v673 = vmul.f32 %v672, %v670
        %v674 = vmul.f32 %v672, %v671
        %v675 = vadd.f32 %v643, %v673
        %v676 = vadd.f32 %v644, %v674
        %s677 = sld [smem:[#allocation5 + $0x2c]]
        %v678 = vld [vmem:[%s314 + $0x6] sm:$0xff]
        %v679 = vld [vmem:[%s314 + $0xe] sm:$0xff]
        %v680 = vstv %s677
        %v681 = vmul.f32 %v680, %v678
        %v682 = vmul.f32 %v680, %v679
        %v683 = vadd.f32 %v651, %v681
        %v684 = vadd.f32 %v652, %v682
        %s685 = sld [smem:[#allocation5 + $0x3]]
        %v686 = vld [vmem:[%s333] sm:$0xff]
        %v687 = vld [vmem:[%s333 + $0x8] sm:$0xff]
        %v688 = vstv %s685
        %v689 = vmul.f32 %v688, %v686
        %v690 = vmul.f32 %v688, %v687
        %v691 = vadd.f32 %v659, %v689
        %v692 = vadd.f32 %v660, %v690
        %s693 = sld [smem:[#allocation5 + $0xa]]
        %v694 = vld [vmem:[%s333 + $0x1] sm:$0xff]
        %v695 = vld [vmem:[%s333 + $0x9] sm:$0xff]
        %v696 = vstv %s693
        %v697 = vmul.f32 %v696, %v694
        %v698 = vmul.f32 %v696, %v695
        %v699 = vadd.f32 %v667, %v697
        %v700 = vadd.f32 %v668, %v698
        %s701 = sld [smem:[#allocation5 + $0x11]]
        %v702 = vld [vmem:[%s333 + $0x2] sm:$0xff]
        %v703 = vld [vmem:[%s333 + $0xa] sm:$0xff]
        %v704 = vstv %s701
        %v705 = vmul.f32 %v704, %v702
        %v706 = vmul.f32 %v704, %v703
        %v707 = vadd.f32 %v675, %v705
        %v708 = vadd.f32 %v676, %v706
        %s709 = sld [smem:[#allocation5 + $0x18]]
        %v710 = vld [vmem:[%s333 + $0x3] sm:$0xff]
        %v711 = vld [vmem:[%s333 + $0xb] sm:$0xff]
        %v712 = vstv %s709
        %v713 = vmul.f32 %v712, %v710
        %v714 = vmul.f32 %v712, %v711
        %v715 = vadd.f32 %v683, %v713
        %v716 = vadd.f32 %v684, %v714
        %s717 = sld [smem:[#allocation5 + $0x1f]]
        %v718 = vld [vmem:[%s333 + $0x4] sm:$0xff]
        %v719 = vld [vmem:[%s333 + $0xc] sm:$0xff]
        %v720 = vstv %s717
        %v721 = vmul.f32 %v720, %v718
        %v722 = vmul.f32 %v720, %v719
        %v723 = vadd.f32 %v691, %v721
        %v724 = vadd.f32 %v692, %v722
        %s725 = sld [smem:[#allocation5 + $0x26]]
        %v726 = vld [vmem:[%s333 + $0x5] sm:$0xff]
        %v727 = vld [vmem:[%s333 + $0xd] sm:$0xff]
        %v728 = vstv %s725
        %v729 = vmul.f32 %v728, %v726
        %v730 = vmul.f32 %v728, %v727
        %v731 = vadd.f32 %v699, %v729
        %v732 = vadd.f32 %v700, %v730
        %s733 = sld [smem:[#allocation5 + $0x2d]]
        %v734 = vld [vmem:[%s333 + $0x6] sm:$0xff]
        %v735 = vld [vmem:[%s333 + $0xe] sm:$0xff]
        %v736 = vstv %s733
        %v737 = vmul.f32 %v736, %v734
        %v738 = vmul.f32 %v736, %v735
        %v739 = vadd.f32 %v707, %v737
        %v740 = vadd.f32 %v708, %v738
        %s741 = sld [smem:[#allocation5 + $0x4]]
        %v742 = vld [vmem:[%s352] sm:$0xff]
        %v743 = vld [vmem:[%s352 + $0x8] sm:$0xff]
        %v744 = vstv %s741
        %v745 = vmul.f32 %v744, %v742
        %v746 = vmul.f32 %v744, %v743
        %v747 = vadd.f32 %v715, %v745
        %v748 = vadd.f32 %v716, %v746
        %s749 = sld [smem:[#allocation5 + $0xb]]
        %v750 = vld [vmem:[%s352 + $0x1] sm:$0xff]
        %v751 = vld [vmem:[%s352 + $0x9] sm:$0xff]
        %v752 = vstv %s749
        %v753 = vmul.f32 %v752, %v750
        %v754 = vmul.f32 %v752, %v751
        %v755 = vadd.f32 %v723, %v753
        %v756 = vadd.f32 %v724, %v754
        %s757 = sld [smem:[#allocation5 + $0x12]]
        %v758 = vld [vmem:[%s352 + $0x2] sm:$0xff]
        %v759 = vld [vmem:[%s352 + $0xa] sm:$0xff]
        %v760 = vstv %s757
        %v761 = vmul.f32 %v760, %v758
        %v762 = vmul.f32 %v760, %v759
        %v763 = vadd.f32 %v731, %v761
        %v764 = vadd.f32 %v732, %v762
        %s765 = sld [smem:[#allocation5 + $0x19]]
        %v766 = vld [vmem:[%s352 + $0x3] sm:$0xff]
        %v767 = vld [vmem:[%s352 + $0xb] sm:$0xff]
        %v768 = vstv %s765
        %v769 = vmul.f32 %v768, %v766
        %v770 = vmul.f32 %v768, %v767
        %v771 = vadd.f32 %v739, %v769
        %v772 = vadd.f32 %v740, %v770
        %s773 = sld [smem:[#allocation5 + $0x20]]
        %v774 = vld [vmem:[%s352 + $0x4] sm:$0xff]
        %v775 = vld [vmem:[%s352 + $0xc] sm:$0xff]
        %v776 = vstv %s773
        %v777 = vmul.f32 %v776, %v774
        %v778 = vmul.f32 %v776, %v775
        %v779 = vadd.f32 %v747, %v777
        %v780 = vadd.f32 %v748, %v778
        %s781 = sld [smem:[#allocation5 + $0x27]]
        %v782 = vld [vmem:[%s352 + $0x5] sm:$0xff]
        %v783 = vld [vmem:[%s352 + $0xd] sm:$0xff]
        %v784 = vstv %s781
        %v785 = vmul.f32 %v784, %v782
        %v786 = vmul.f32 %v784, %v783
        %v787 = vadd.f32 %v755, %v785
        %v788 = vadd.f32 %v756, %v786
        %s789 = sld [smem:[#allocation5 + $0x2e]]
        %v790 = vld [vmem:[%s352 + $0x6] sm:$0xff]
        %v791 = vld [vmem:[%s352 + $0xe] sm:$0xff]
        %v792 = vstv %s789
        %v793 = vmul.f32 %v792, %v790
        %v794 = vmul.f32 %v792, %v791
        %v795 = vadd.f32 %v763, %v793
        %v796 = vadd.f32 %v764, %v794
        %s797 = sld [smem:[#allocation5 + $0x5]]
        %v798 = vld [vmem:[%s371] sm:$0xff]
        %v799 = vld [vmem:[%s371 + $0x8] sm:$0xff]
        %v800 = vstv %s797
        %v801 = vmul.f32 %v800, %v798
        %v802 = vmul.f32 %v800, %v799
        %v803 = vadd.f32 %v771, %v801
        %v804 = vadd.f32 %v772, %v802
        %s805 = sld [smem:[#allocation5 + $0xc]]
        %v806 = vld [vmem:[%s371 + $0x1] sm:$0xff]
        %v807 = vld [vmem:[%s371 + $0x9] sm:$0xff]
        %v808 = vstv %s805
        %v809 = vmul.f32 %v808, %v806
        %v810 = vmul.f32 %v808, %v807
        %v811 = vadd.f32 %v779, %v809
        %v812 = vadd.f32 %v780, %v810
        %s813 = sld [smem:[#allocation5 + $0x13]]
        %v814 = vld [vmem:[%s371 + $0x2] sm:$0xff]
        %v815 = vld [vmem:[%s371 + $0xa] sm:$0xff]
        %v816 = vstv %s813
        %v817 = vmul.f32 %v816, %v814
        %v818 = vmul.f32 %v816, %v815
        %v819 = vadd.f32 %v787, %v817
        %v820 = vadd.f32 %v788, %v818
        %s821 = sld [smem:[#allocation5 + $0x1a]]
        %v822 = vld [vmem:[%s371 + $0x3] sm:$0xff]
        %v823 = vld [vmem:[%s371 + $0xb] sm:$0xff]
        %v824 = vstv %s821
        %v825 = vmul.f32 %v824, %v822
        %v826 = vmul.f32 %v824, %v823
        %v827 = vadd.f32 %v795, %v825
        %v828 = vadd.f32 %v796, %v826
        %s829 = sld [smem:[#allocation5 + $0x21]]
        %v830 = vld [vmem:[%s371 + $0x4] sm:$0xff]
        %v831 = vld [vmem:[%s371 + $0xc] sm:$0xff]
        %v832 = vstv %s829
        %v833 = vmul.f32 %v832, %v830
        %v834 = vmul.f32 %v832, %v831
        %v835 = vadd.f32 %v803, %v833
        %v836 = vadd.f32 %v804, %v834
        %s837 = sld [smem:[#allocation5 + $0x28]]
        %v838 = vld [vmem:[%s371 + $0x5] sm:$0xff]
        %v839 = vld [vmem:[%s371 + $0xd] sm:$0xff]
        %v840 = vstv %s837
        %v841 = vmul.f32 %v840, %v838
        %v842 = vmul.f32 %v840, %v839
        %v843 = vadd.f32 %v811, %v841
        %v844 = vadd.f32 %v812, %v842
        %s845 = sld [smem:[#allocation5 + $0x2f]]
        %v846 = vld [vmem:[%s371 + $0x6] sm:$0xff]
        %v847 = vld [vmem:[%s371 + $0xe] sm:$0xff]
        %v848 = vstv %s845
        %v849 = vmul.f32 %v848, %v846
        %v850 = vmul.f32 %v848, %v847
        %v851 = vadd.f32 %v819, %v849
        %v852 = vadd.f32 %v820, %v850
        %s853 = sld [smem:[#allocation5 + $0x6]]
        %v854 = vld [vmem:[%s390] sm:$0xff]
        %v855 = vld [vmem:[%s390 + $0x8] sm:$0xff]
        %v856 = vstv %s853
        %v857 = vmul.f32 %v856, %v854
        %v858 = vmul.f32 %v856, %v855
        %v859 = vadd.f32 %v827, %v857
        %v860 = vadd.f32 %v828, %v858
        %s861 = sld [smem:[#allocation5 + $0xd]]
        %v862 = vld [vmem:[%s390 + $0x1] sm:$0xff]
        %v863 = vld [vmem:[%s390 + $0x9] sm:$0xff]
        %v864 = vstv %s861
        %v865 = vmul.f32 %v864, %v862
        %v866 = vmul.f32 %v864, %v863
        %v867 = vadd.f32 %v835, %v865
        %v868 = vadd.f32 %v836, %v866
        %s869 = sld [smem:[#allocation5 + $0x14]]
        %v870 = vld [vmem:[%s390 + $0x2] sm:$0xff]
        %v871 = vld [vmem:[%s390 + $0xa] sm:$0xff]
        %v872 = vstv %s869
        %v873 = vmul.f32 %v872, %v870
        %v874 = vmul.f32 %v872, %v871
        %v875 = vadd.f32 %v843, %v873
        %v876 = vadd.f32 %v844, %v874
        %s877 = sld [smem:[#allocation5 + $0x1b]]
        %v878 = vld [vmem:[%s390 + $0x3] sm:$0xff]
        %v879 = vld [vmem:[%s390 + $0xb] sm:$0xff]
        %v880 = vstv %s877
        %v881 = vmul.f32 %v880, %v878
        %v882 = vmul.f32 %v880, %v879
        %v883 = vadd.f32 %v851, %v881
        %v884 = vadd.f32 %v852, %v882
        %s885 = sld [smem:[#allocation5 + $0x22]]
        %v886 = vld [vmem:[%s390 + $0x4] sm:$0xff]
        %v887 = vld [vmem:[%s390 + $0xc] sm:$0xff]
        %v888 = vstv %s885
        %v889 = vmul.f32 %v888, %v886
        %v890 = vmul.f32 %v888, %v887
        %v891 = vadd.f32 %v859, %v889
        %v892 = vadd.f32 %v860, %v890
        %s893 = sld [smem:[#allocation5 + $0x29]]
        %v894 = vld [vmem:[%s390 + $0x5] sm:$0xff]
        %v895 = vld [vmem:[%s390 + $0xd] sm:$0xff]
        %v896 = vstv %s893
        %v897 = vmul.f32 %v896, %v894
        %v898 = vmul.f32 %v896, %v895
        %v899 = vadd.f32 %v867, %v897
        %v900 = vadd.f32 %v868, %v898
        %s901 = sld [smem:[#allocation5 + $0x30]]
        %v902 = vld [vmem:[%s390 + $0x6] sm:$0xff]
        %v903 = vld [vmem:[%s390 + $0xe] sm:$0xff]
        %v904 = vstv %s901
        %v905 = vmul.f32 %v904, %v902
        %v906 = vmul.f32 %v904, %v903
        %v907 = vadd.f32 %v875, %v905
        %v908 = vadd.f32 %v876, %v906
        %s909 = sld [smem:[#allocation5 + $0x31]]
        %v910 = vld [vmem:[%s397] sm:$0xff]
        %v911 = vld [vmem:[%s397 + $0x8] sm:$0xff]
        %v912 = vstv %s909
        %v913 = vmul.f32 %v912, %v910
        %v914 = vmul.f32 %v912, %v911
        %v915 = vadd.f32 %v883, %v913
        %v916 = vadd.f32 %v884, %v914
        %s917 = sld [smem:[#allocation5 + $0x38]]
        %v918 = vld [vmem:[%s397 + $0x1] sm:$0xff]
        %v919 = vld [vmem:[%s397 + $0x9] sm:$0xff]
        %v920 = vstv %s917
        %v921 = vmul.f32 %v920, %v918
        %v922 = vmul.f32 %v920, %v919
        %v923 = vadd.f32 %v891, %v921
        %v924 = vadd.f32 %v892, %v922
        %s925 = sld [smem:[#allocation5 + $0x3f]]
        %v926 = vld [vmem:[%s397 + $0x2] sm:$0xff]
        %v927 = vld [vmem:[%s397 + $0xa] sm:$0xff]
        %v928 = vstv %s925
        %v929 = vmul.f32 %v928, %v926
        %v930 = vmul.f32 %v928, %v927
        %v931 = vadd.f32 %v899, %v929
        %v932 = vadd.f32 %v900, %v930
        %s933 = sld [smem:[#allocation5 + $0x46]]
        %v934 = vld [vmem:[%s397 + $0x3] sm:$0xff]
        %v935 = vld [vmem:[%s397 + $0xb] sm:$0xff]
        %v936 = vstv %s933
        %v937 = vmul.f32 %v936, %v934
        %v938 = vmul.f32 %v936, %v935
        %v939 = vadd.f32 %v907, %v937
        %v940 = vadd.f32 %v908, %v938
        %s941 = sld [smem:[#allocation5 + $0x4d]]
        %v942 = vld [vmem:[%s397 + $0x4] sm:$0xff]
        %v943 = vld [vmem:[%s397 + $0xc] sm:$0xff]
        %v944 = vstv %s941
        %v945 = vmul.f32 %v944, %v942
        %v946 = vmul.f32 %v944, %v943
        %v947 = vadd.f32 %v915, %v945
        %v948 = vadd.f32 %v916, %v946
        %s949 = sld [smem:[#allocation5 + $0x54]]
        %v950 = vld [vmem:[%s397 + $0x5] sm:$0xff]
        %v951 = vld [vmem:[%s397 + $0xd] sm:$0xff]
        %v952 = vstv %s949
        %v953 = vmul.f32 %v952, %v950
        %v954 = vmul.f32 %v952, %v951
        %v955 = vadd.f32 %v923, %v953
        %v956 = vadd.f32 %v924, %v954
        %s957 = sld [smem:[#allocation5 + $0x5b]]
        %v958 = vld [vmem:[%s397 + $0x6] sm:$0xff]
        %v959 = vld [vmem:[%s397 + $0xe] sm:$0xff]
        %v960 = vstv %s957
        %v961 = vmul.f32 %v960, %v958
        %v962 = vmul.f32 %v960, %v959
        %v963 = vadd.f32 %v931, %v961
        %v964 = vadd.f32 %v932, %v962
        %s965 = sld [smem:[#allocation5 + $0x32]]
        %v966 = vld [vmem:[%s416] sm:$0xff]
        %v967 = vld [vmem:[%s416 + $0x8] sm:$0xff]
        %v968 = vstv %s965
        %v969 = vmul.f32 %v968, %v966
        %v970 = vmul.f32 %v968, %v967
        %v971 = vadd.f32 %v939, %v969
        %v972 = vadd.f32 %v940, %v970
        %s973 = sld [smem:[#allocation5 + $0x39]]
        %v974 = vld [vmem:[%s416 + $0x1] sm:$0xff]
        %v975 = vld [vmem:[%s416 + $0x9] sm:$0xff]
        %v976 = vstv %s973
        %v977 = vmul.f32 %v976, %v974
        %v978 = vmul.f32 %v976, %v975
        %v979 = vadd.f32 %v947, %v977
        %v980 = vadd.f32 %v948, %v978
        %s981 = sld [smem:[#allocation5 + $0x40]]
        %v982 = vld [vmem:[%s416 + $0x2] sm:$0xff]
        %v983 = vld [vmem:[%s416 + $0xa] sm:$0xff]
        %v984 = vstv %s981
        %v985 = vmul.f32 %v984, %v982
        %v986 = vmul.f32 %v984, %v983
        %v987 = vadd.f32 %v955, %v985
        %v988 = vadd.f32 %v956, %v986
        %s989 = sld [smem:[#allocation5 + $0x47]]
        %v990 = vld [vmem:[%s416 + $0x3] sm:$0xff]
        %v991 = vld [vmem:[%s416 + $0xb] sm:$0xff]
        %v992 = vstv %s989
        %v993 = vmul.f32 %v992, %v990
        %v994 = vmul.f32 %v992, %v991
        %v995 = vadd.f32 %v963, %v993
        %v996 = vadd.f32 %v964, %v994
        %s997 = sld [smem:[#allocation5 + $0x4e]]
        %v998 = vld [vmem:[%s416 + $0x4] sm:$0xff]
        %v999 = vld [vmem:[%s416 + $0xc] sm:$0xff]
        %v1000 = vstv %s997
        %v1001 = vmul.f32 %v1000, %v998
        %v1002 = vmul.f32 %v1000, %v999
        %v1003 = vadd.f32 %v971, %v1001
        %v1004 = vadd.f32 %v972, %v1002
        %s1005 = sld [smem:[#allocation5 + $0x55]]
        %v1006 = vld [vmem:[%s416 + $0x5] sm:$0xff]
        %v1007 = vld [vmem:[%s416 + $0xd] sm:$0xff]
        %v1008 = vstv %s1005
        %v1009 = vmul.f32 %v1008, %v1006
        %v1010 = vmul.f32 %v1008, %v1007
        %v1011 = vadd.f32 %v979, %v1009
        %v1012 = vadd.f32 %v980, %v1010
        %s1013 = sld [smem:[#allocation5 + $0x5c]]
        %v1014 = vld [vmem:[%s416 + $0x6] sm:$0xff]
        %v1015 = vld [vmem:[%s416 + $0xe] sm:$0xff]
        %v1016 = vstv %s1013
        %v1017 = vmul.f32 %v1016, %v1014
        %v1018 = vmul.f32 %v1016, %v1015
        %v1019 = vadd.f32 %v987, %v1017
        %v1020 = vadd.f32 %v988, %v1018
        %s1021 = sld [smem:[#allocation5 + $0x33]]
        %v1022 = vld [vmem:[%s435] sm:$0xff]
        %v1023 = vld [vmem:[%s435 + $0x8] sm:$0xff]
        %v1024 = vstv %s1021
        %v1025 = vmul.f32 %v1024, %v1022
        %v1026 = vmul.f32 %v1024, %v1023
        %v1027 = vadd.f32 %v995, %v1025
        %v1028 = vadd.f32 %v996, %v1026
        %s1029 = sld [smem:[#allocation5 + $0x3a]]
        %v1030 = vld [vmem:[%s435 + $0x1] sm:$0xff]
        %v1031 = vld [vmem:[%s435 + $0x9] sm:$0xff]
        %v1032 = vstv %s1029
        %v1033 = vmul.f32 %v1032, %v1030
        %v1034 = vmul.f32 %v1032, %v1031
        %v1035 = vadd.f32 %v1003, %v1033
        %v1036 = vadd.f32 %v1004, %v1034
        %s1037 = sld [smem:[#allocation5 + $0x41]]
        %v1038 = vld [vmem:[%s435 + $0x2] sm:$0xff]
        %v1039 = vld [vmem:[%s435 + $0xa] sm:$0xff]
        %v1040 = vstv %s1037
        %v1041 = vmul.f32 %v1040, %v1038
        %v1042 = vmul.f32 %v1040, %v1039
        %v1043 = vadd.f32 %v1011, %v1041
        %v1044 = vadd.f32 %v1012, %v1042
        %s1045 = sld [smem:[#allocation5 + $0x48]]
        %v1046 = vld [vmem:[%s435 + $0x3] sm:$0xff]
        %v1047 = vld [vmem:[%s435 + $0xb] sm:$0xff]
        %v1048 = vstv %s1045
        %v1049 = vmul.f32 %v1048, %v1046
        %v1050 = vmul.f32 %v1048, %v1047
        %v1051 = vadd.f32 %v1019, %v1049
        %v1052 = vadd.f32 %v1020, %v1050
        %s1053 = sld [smem:[#allocation5 + $0x4f]]
        %v1054 = vld [vmem:[%s435 + $0x4] sm:$0xff]
        %v1055 = vld [vmem:[%s435 + $0xc] sm:$0xff]
        %v1056 = vstv %s1053
        %v1057 = vmul.f32 %v1056, %v1054
        %v1058 = vmul.f32 %v1056, %v1055
        %v1059 = vadd.f32 %v1027, %v1057
        %v1060 = vadd.f32 %v1028, %v1058
        %s1061 = sld [smem:[#allocation5 + $0x56]]
        %v1062 = vld [vmem:[%s435 + $0x5] sm:$0xff]
        %v1063 = vld [vmem:[%s435 + $0xd] sm:$0xff]
        %v1064 = vstv %s1061
        %v1065 = vmul.f32 %v1064, %v1062
        %v1066 = vmul.f32 %v1064, %v1063
        %v1067 = vadd.f32 %v1035, %v1065
        %v1068 = vadd.f32 %v1036, %v1066
        %s1069 = sld [smem:[#allocation5 + $0x5d]]
        %v1070 = vld [vmem:[%s435 + $0x6] sm:$0xff]
        %v1071 = vld [vmem:[%s435 + $0xe] sm:$0xff]
        %v1072 = vstv %s1069
        %v1073 = vmul.f32 %v1072, %v1070
        %v1074 = vmul.f32 %v1072, %v1071
        %v1075 = vadd.f32 %v1043, %v1073
        %v1076 = vadd.f32 %v1044, %v1074
        %s1077 = sld [smem:[#allocation5 + $0x34]]
        %v1078 = vld [vmem:[%s454] sm:$0xff]
        %v1079 = vld [vmem:[%s454 + $0x8] sm:$0xff]
        %v1080 = vstv %s1077
        %v1081 = vmul.f32 %v1080, %v1078
        %v1082 = vmul.f32 %v1080, %v1079
        %v1083 = vadd.f32 %v1051, %v1081
        %v1084 = vadd.f32 %v1052, %v1082
        %s1085 = sld [smem:[#allocation5 + $0x3b]]
        %v1086 = vld [vmem:[%s454 + $0x1] sm:$0xff]
        %v1087 = vld [vmem:[%s454 + $0x9] sm:$0xff]
        %v1088 = vstv %s1085
        %v1089 = vmul.f32 %v1088, %v1086
        %v1090 = vmul.f32 %v1088, %v1087
        %v1091 = vadd.f32 %v1059, %v1089
        %v1092 = vadd.f32 %v1060, %v1090
        %s1093 = sld [smem:[#allocation5 + $0x42]]
        %v1094 = vld [vmem:[%s454 + $0x2] sm:$0xff]
        %v1095 = vld [vmem:[%s454 + $0xa] sm:$0xff]
        %v1096 = vstv %s1093
        %v1097 = vmul.f32 %v1096, %v1094
        %v1098 = vmul.f32 %v1096, %v1095
        %v1099 = vadd.f32 %v1067, %v1097
        %v1100 = vadd.f32 %v1068, %v1098
        %s1101 = sld [smem:[#allocation5 + $0x49]]
        %v1102 = vld [vmem:[%s454 + $0x3] sm:$0xff]
        %v1103 = vld [vmem:[%s454 + $0xb] sm:$0xff]
        %v1104 = vstv %s1101
        %v1105 = vmul.f32 %v1104, %v1102
        %v1106 = vmul.f32 %v1104, %v1103
        %v1107 = vadd.f32 %v1075, %v1105
        %v1108 = vadd.f32 %v1076, %v1106
        %s1109 = sld [smem:[#allocation5 + $0x50]]
        %v1110 = vld [vmem:[%s454 + $0x4] sm:$0xff]
        %v1111 = vld [vmem:[%s454 + $0xc] sm:$0xff]
        %v1112 = vstv %s1109
        %v1113 = vmul.f32 %v1112, %v1110
        %v1114 = vmul.f32 %v1112, %v1111
        %v1115 = vadd.f32 %v1083, %v1113
        %v1116 = vadd.f32 %v1084, %v1114
        %s1117 = sld [smem:[#allocation5 + $0x57]]
        %v1118 = vld [vmem:[%s454 + $0x5] sm:$0xff]
        %v1119 = vld [vmem:[%s454 + $0xd] sm:$0xff]
        %v1120 = vstv %s1117
        %v1121 = vmul.f32 %v1120, %v1118
        %v1122 = vmul.f32 %v1120, %v1119
        %v1123 = vadd.f32 %v1091, %v1121
        %v1124 = vadd.f32 %v1092, %v1122
        %s1125 = sld [smem:[#allocation5 + $0x5e]]
        %v1126 = vld [vmem:[%s454 + $0x6] sm:$0xff]
        %v1127 = vld [vmem:[%s454 + $0xe] sm:$0xff]
        %v1128 = vstv %s1125
        %v1129 = vmul.f32 %v1128, %v1126
        %v1130 = vmul.f32 %v1128, %v1127
        %v1131 = vadd.f32 %v1099, %v1129
        %v1132 = vadd.f32 %v1100, %v1130
        %s1133 = sld [smem:[#allocation5 + $0x35]]
        %v1134 = vld [vmem:[%s473] sm:$0xff]
        %v1135 = vld [vmem:[%s473 + $0x8] sm:$0xff]
        %v1136 = vstv %s1133
        %v1137 = vmul.f32 %v1136, %v1134
        %v1138 = vmul.f32 %v1136, %v1135
        %v1139 = vadd.f32 %v1107, %v1137
        %v1140 = vadd.f32 %v1108, %v1138
        %s1141 = sld [smem:[#allocation5 + $0x3c]]
        %v1142 = vld [vmem:[%s473 + $0x1] sm:$0xff]
        %v1143 = vld [vmem:[%s473 + $0x9] sm:$0xff]
        %v1144 = vstv %s1141
        %v1145 = vmul.f32 %v1144, %v1142
        %v1146 = vmul.f32 %v1144, %v1143
        %v1147 = vadd.f32 %v1115, %v1145
        %v1148 = vadd.f32 %v1116, %v1146
        %s1149 = sld [smem:[#allocation5 + $0x43]]
        %v1150 = vld [vmem:[%s473 + $0x2] sm:$0xff]
        %v1151 = vld [vmem:[%s473 + $0xa] sm:$0xff]
        %v1152 = vstv %s1149
        %v1153 = vmul.f32 %v1152, %v1150
        %v1154 = vmul.f32 %v1152, %v1151
        %v1155 = vadd.f32 %v1123, %v1153
        %v1156 = vadd.f32 %v1124, %v1154
        %s1157 = sld [smem:[#allocation5 + $0x4a]]
        %v1158 = vld [vmem:[%s473 + $0x3] sm:$0xff]
        %v1159 = vld [vmem:[%s473 + $0xb] sm:$0xff]
        %v1160 = vstv %s1157
        %v1161 = vmul.f32 %v1160, %v1158
        %v1162 = vmul.f32 %v1160, %v1159
        %v1163 = vadd.f32 %v1131, %v1161
        %v1164 = vadd.f32 %v1132, %v1162
        %s1165 = sld [smem:[#allocation5 + $0x51]]
        %v1166 = vld [vmem:[%s473 + $0x4] sm:$0xff]
        %v1167 = vld [vmem:[%s473 + $0xc] sm:$0xff]
        %v1168 = vstv %s1165
        %v1169 = vmul.f32 %v1168, %v1166
        %v1170 = vmul.f32 %v1168, %v1167
        %v1171 = vadd.f32 %v1139, %v1169
        %v1172 = vadd.f32 %v1140, %v1170
        %s1173 = sld [smem:[#allocation5 + $0x58]]
        %v1174 = vld [vmem:[%s473 + $0x5] sm:$0xff]
        %v1175 = vld [vmem:[%s473 + $0xd] sm:$0xff]
        %v1176 = vstv %s1173
        %v1177 = vmul.f32 %v1176, %v1174
        %v1178 = vmul.f32 %v1176, %v1175
        %v1179 = vadd.f32 %v1147, %v1177
        %v1180 = vadd.f32 %v1148, %v1178
        %s1181 = sld [smem:[#allocation5 + $0x5f]]
        %v1182 = vld [vmem:[%s473 + $0x6] sm:$0xff]
        %v1183 = vld [vmem:[%s473 + $0xe] sm:$0xff]
        %v1184 = vstv %s1181
        %v1185 = vmul.f32 %v1184, %v1182
        %v1186 = vmul.f32 %v1184, %v1183
        %v1187 = vadd.f32 %v1155, %v1185
        %v1188 = vadd.f32 %v1156, %v1186
        %s1189 = sld [smem:[#allocation5 + $0x36]]
        %v1190 = vld [vmem:[%s492] sm:$0xff]
        %v1191 = vld [vmem:[%s492 + $0x8] sm:$0xff]
        %v1192 = vstv %s1189
        %v1193 = vmul.f32 %v1192, %v1190
        %v1194 = vmul.f32 %v1192, %v1191
        %v1195 = vadd.f32 %v1163, %v1193
        %v1196 = vadd.f32 %v1164, %v1194
        %s1197 = sld [smem:[#allocation5 + $0x3d]]
        %v1198 = vld [vmem:[%s492 + $0x1] sm:$0xff]
        %v1199 = vld [vmem:[%s492 + $0x9] sm:$0xff]
        %v1200 = vstv %s1197
        %v1201 = vmul.f32 %v1200, %v1198
        %v1202 = vmul.f32 %v1200, %v1199
        %v1203 = vadd.f32 %v1171, %v1201
        %v1204 = vadd.f32 %v1172, %v1202
        %s1205 = sld [smem:[#allocation5 + $0x44]]
        %v1206 = vld [vmem:[%s492 + $0x2] sm:$0xff]
        %v1207 = vld [vmem:[%s492 + $0xa] sm:$0xff]
        %v1208 = vstv %s1205
        %v1209 = vmul.f32 %v1208, %v1206
        %v1210 = vmul.f32 %v1208, %v1207
        %v1211 = vadd.f32 %v1179, %v1209
        %v1212 = vadd.f32 %v1180, %v1210
        %s1213 = sld [smem:[#allocation5 + $0x4b]]
        %v1214 = vld [vmem:[%s492 + $0x3] sm:$0xff]
        %v1215 = vld [vmem:[%s492 + $0xb] sm:$0xff]
        %v1216 = vstv %s1213
        %v1217 = vmul.f32 %v1216, %v1214
        %v1218 = vmul.f32 %v1216, %v1215
        %v1219 = vadd.f32 %v1187, %v1217
        %v1220 = vadd.f32 %v1188, %v1218
        %s1221 = sld [smem:[#allocation5 + $0x52]]
        %v1222 = vld [vmem:[%s492 + $0x4] sm:$0xff]
        %v1223 = vld [vmem:[%s492 + $0xc] sm:$0xff]
        %v1224 = vstv %s1221
        %v1225 = vmul.f32 %v1224, %v1222
        %v1226 = vmul.f32 %v1224, %v1223
        %v1227 = vadd.f32 %v1195, %v1225
        %v1228 = vadd.f32 %v1196, %v1226
        %s1229 = sld [smem:[#allocation5 + $0x59]]
        %v1230 = vld [vmem:[%s492 + $0x5] sm:$0xff]
        %v1231 = vld [vmem:[%s492 + $0xd] sm:$0xff]
        %v1232 = vstv %s1229
        %v1233 = vmul.f32 %v1232, %v1230
        %v1234 = vmul.f32 %v1232, %v1231
        %v1235 = vadd.f32 %v1203, %v1233
        %v1236 = vadd.f32 %v1204, %v1234
        %s1237 = sld [smem:[#allocation5 + $0x60]]
        %v1238 = vld [vmem:[%s492 + $0x6] sm:$0xff]
        %v1239 = vld [vmem:[%s492 + $0xe] sm:$0xff]
        %v1240 = vstv %s1237
        %v1241 = vmul.f32 %v1240, %v1238
        %v1242 = vmul.f32 %v1240, %v1239
        %v1243 = vadd.f32 %v1211, %v1241
        %v1244 = vadd.f32 %v1212, %v1242
        %s1245 = sld [smem:[#allocation5 + $0x37]]
        %v1246 = vld [vmem:[%s511] sm:$0xff]
        %v1247 = vld [vmem:[%s511 + $0x8] sm:$0xff]
        %v1248 = vstv %s1245
        %v1249 = vmul.f32 %v1248, %v1246
        %v1250 = vmul.f32 %v1248, %v1247
        %v1251 = vadd.f32 %v1219, %v1249
        %v1252 = vadd.f32 %v1220, %v1250
        %s1253 = sld [smem:[#allocation5 + $0x3e]]
        %v1254 = vld [vmem:[%s511 + $0x1] sm:$0xff]
        %v1255 = vld [vmem:[%s511 + $0x9] sm:$0xff]
        %v1256 = vstv %s1253
        %v1257 = vmul.f32 %v1256, %v1254
        %v1258 = vmul.f32 %v1256, %v1255
        %v1259 = vadd.f32 %v1227, %v1257
        %v1260 = vadd.f32 %v1228, %v1258
        %s1261 = sld [smem:[#allocation5 + $0x45]]
        %v1262 = vld [vmem:[%s511 + $0x2] sm:$0xff]
        %v1263 = vld [vmem:[%s511 + $0xa] sm:$0xff]
        %v1264 = vstv %s1261
        %v1265 = vmul.f32 %v1264, %v1262
        %v1266 = vmul.f32 %v1264, %v1263
        %v1267 = vadd.f32 %v1235, %v1265
        %v1268 = vadd.f32 %v1236, %v1266
        %s1269 = sld [smem:[#allocation5 + $0x4c]]
        %v1270 = vld [vmem:[%s511 + $0x3] sm:$0xff]
        %v1271 = vld [vmem:[%s511 + $0xb] sm:$0xff]
        %v1272 = vstv %s1269
        %v1273 = vmul.f32 %v1272, %v1270
        %v1274 = vmul.f32 %v1272, %v1271
        %v1275 = vadd.f32 %v1243, %v1273
        %v1276 = vadd.f32 %v1244, %v1274
        %s1277 = sld [smem:[#allocation5 + $0x53]]
        %v1278 = vld [vmem:[%s511 + $0x4] sm:$0xff]
        %v1279 = vld [vmem:[%s511 + $0xc] sm:$0xff]
        %v1280 = vstv %s1277
        %v1281 = vmul.f32 %v1280, %v1278
        %v1282 = vmul.f32 %v1280, %v1279
        %v1283 = vadd.f32 %v1251, %v1281
        %v1284 = vadd.f32 %v1252, %v1282
        %s1285 = sld [smem:[#allocation5 + $0x5a]]
        %v1286 = vld [vmem:[%s511 + $0x5] sm:$0xff]
        %v1287 = vld [vmem:[%s511 + $0xd] sm:$0xff]
        %v1288 = vstv %s1285
        %v1289 = vmul.f32 %v1288, %v1286
        %v1290 = vmul.f32 %v1288, %v1287
        %v1291 = vadd.f32 %v1259, %v1289
        %v1292 = vadd.f32 %v1260, %v1290
        %s1293 = sld [smem:[#allocation5 + $0x61]]
        %v1294 = vld [vmem:[%s511 + $0x6] sm:$0xff]
        %v1295 = vld [vmem:[%s511 + $0xe] sm:$0xff]
        %v1296 = vstv %s1293
        %v1297 = vmul.f32 %v1296, %v1294
        %v1298 = vmul.f32 %v1296, %v1295
        %v1299 = vadd.f32 %v1267, %v1297
        %v1300 = vadd.f32 %v1268, %v1298
        %v1301 = vadd.f32 %v1291, %v1299
        %v1302 = vadd.f32 %v1292, %v1300
        %v1303 = vadd.f32 %v1275, %v1283
        %v1304 = vadd.f32 %v1276, %v1284
        %v1305 = vadd.f32 %v1301, %v1303
        %v1306 = vadd.f32 %v1302, %v1304
        %v1307 = vxor.u32 %v1305, 2147483648
        %v1308 = vxor.u32 %v1306, 2147483648
        %v1309 = vmul.f32 %v1307, 1.442695
        %v1310 = vpow.pop %v1309
        %v1311 = vmul.f32 %v1308, 1.442695
        %v1312 = vpow.pop %v1311
        %v1313 = vadd.f32 %v1310, 1.0
        %v1314 = vadd.f32 %v1312, 1.0
        %v1315 = vrcp.pop %v1313
        %v1316 = vmul.f32 1.0, %v1315
        %v1317 = vrcp.pop %v1314
        %v1318 = vmul.f32 1.0, %v1317
        %v1319 = vld [vmem:[%s180] sm:$0xff]
        %v1320 = vld [vmem:[%s180 + $0x8] sm:$0xff]
        %v1321 = vld [vmem:[%s180 + $0x10] sm:$0xff]
        %v1322 = vld [vmem:[%s180 + $0x18] sm:$0xff]
        %v1323 = vld [vmem:[%s180 + $0x20] sm:$0xff]
        %v1324 = vld [vmem:[%s180 + $0x28] sm:$0xff]
        %v1325 = vld [vmem:[%s180 + $0x30] sm:$0xff]
        %v1326 = vld [vmem:[%s180 + $0x38] sm:$0xff]
        %v1327 = vmul.f32 %v1319, %v1316
        %v1328 = vmul.f32 %v1320, %v1318
        %v1329 = vmul.f32 %v1321, %v1316
        %v1330 = vmul.f32 %v1322, %v1318
        %v1331 = vmul.f32 %v1323, %v1316
        %v1332 = vmul.f32 %v1324, %v1318
        %v1333 = vmul.f32 %v1325, %v1316
        %v1334 = vmul.f32 %v1326, %v1318
        %1335 = vst.msk [vmem:[%s203] sm:$0xff] %vm220, %v1327
        %1336 = vst.msk [vmem:[%s203 + $0x8] sm:$0xff] %vm220, %v1328
        %1337 = vst.msk [vmem:[%s203 + $0x10] sm:$0xff] %vm220, %v1329
        %1338 = vst.msk [vmem:[%s203 + $0x18] sm:$0xff] %vm220, %v1330
        %1339 = vst.msk [vmem:[%s203 + $0x20] sm:$0xff] %vm220, %v1331
        %1340 = vst.msk [vmem:[%s203 + $0x28] sm:$0xff] %vm220, %v1332
        %1341 = vst.msk [vmem:[%s203 + $0x30] sm:$0xff] %vm220, %v1333
        %1342 = vst.msk [vmem:[%s203 + $0x38] sm:$0xff] %vm220, %v1334
        %s1343 = sand.u32 %s98, 1
        %s1344 = scalar_lea.sflag [#allocation7], %s1343
        %s1345 = sand.u32 %s98, 1
        %s1346 = smul.addr %s1345, 64
        %s1347 = scalar_lea.vmem [#allocation10], %s1346
        // Predicated region
        $region41: #{tpu_custom_call.1} parent=31 // pred_check
          %p1348 = pneg %p108
        $region42: #{tpu_custom_call.1} parent=31 // pred_check_branch
          %1350 = sbr.rel (%p1348) target = $region44
        $region43: #{tpu_custom_call.1} parent=31 // pred_region
          %s1352 = ssub.s32 1024, 1024
          %1353 = vsyncadd %s1344, %s1352
          %s1354 = smul.addr %s22, 8
          %s1355 = smul.addr %s1354, 128
          %s1356 = scalar_lea.hbm %s3, %s1355
          %s1357 = sshll.u32 %s1347, 4
          %s1358 = int_to_ptr.vmem [resolvable:$true] %s1357
          %1363 = dma.vmem_to_hbm [thread:$0]  %s1358, 1024, %s1356, %s1344, 128, 128, 8
        $region44: #{tpu_custom_call.1} parent=31 // pred_fallthru
          _
      $region32: #{tpu_custom_call.1} parent=5 // pred_fallthru
        _
      %p1364 = scmp.le.s32.totalorder 2, %s17
      // Predicated region
      $region45: #{tpu_custom_call.1} parent=5 // pred_check
        %p1365 = pneg %p1364
      $region46: #{tpu_custom_call.1} parent=5 // pred_check_branch
        %1367 = sbr.rel (%p1365) target = $region48
      $region47: #{tpu_custom_call.1} parent=5 // pred_region
        %s1368 = ssub.s32 %s17, 2
        // Predicated region
        $region49: #{tpu_custom_call.1} parent=47 // pred_check
          %p1369 = pneg %p114
        $region50: #{tpu_custom_call.1} parent=47 // pred_check_branch
          %1371 = sbr.rel (%p1369) target = $region52
        $region51: #{tpu_custom_call.1} parent=47 // pred_region
          %s1372 = sand.u32 %s99, 1
          %s1373 = scalar_lea.sflag [#allocation7], %s1372
          %s1374 = sand.u32 %s99, 1
          %s1375 = smul.addr %s1374, 64
          %s1376 = scalar_lea.vmem [#allocation10], %s1375
          %1377 = dma.done %s1373, 1024
        $region52: #{tpu_custom_call.1} parent=47 // pred_fallthru
          _
      $region48: #{tpu_custom_call.1} parent=5 // pred_fallthru
        _
    $region6: #{tpu_custom_call.1} parent=1 // loop_footer
      %s21 = sadd.s32 1, %s17
    $region7: #{tpu_custom_call.1} parent=1 // loop_footer_branch
      %16 = sbr.rel target = $region3
    $region8: #{tpu_custom_call.1} parent=1 // loop_exit
      _
    %1378 = vsyncpa [#allocation6], 1
    %s1379 = scalar_lea.sflag [#allocation6], 1
    %1380 = vsyncpa %s1379, 1
    %1381 = vsyncpa [#allocation7], 1
    %s1382 = scalar_lea.sflag [#allocation7], 1
    %1383 = vsyncpa %s1382, 1
    %1384 = vsyncpa [#allocation8], 1
    %s1385 = scalar_lea.sflag [#allocation8], 1
    %1386 = vsyncpa %s1385, 1

</llo_original>
